<compile_context>
chip_gen: v7x
topology: tpu7x:2x2x1
jax: 0.10.0
libtpu: 0.0.40
codegen_flags: <defaults>
</compile_context>

<pallas_src>
import jax
import jax.numpy as jnp
from jax.experimental import pallas as pl
from jax.experimental.pallas import tpu as pltpu

# ----------------- config (FeatureFusionPipeline._init_channels) -----------------
IMAGE_RES = (16, 16)                                   # config.image_resolution
N_SUB_PIXELS = 2                                       # config.n_sub_pixels
SURFEL_CHANNELS = 8                                    # config.surfel_channels
META_FEATURES = 8                                      # conf(1)+normals(3)+ray_dirs(3)+depth(1)
UPSAMPLED_RES = (IMAGE_RES[0] * N_SUB_PIXELS, IMAGE_RES[1] * N_SUB_PIXELS)
IN_CH = 3 + SURFEL_CHANNELS + META_FEATURES            # 19
EMBEDDINGS_LENGTH = 35
STACKED_CH = EMBEDDINGS_LENGTH + META_FEATURES         # 43 = emb + conf + normals + ray + depth
CP = 128                                               # lane-dense padded channel count
ONES_CH = CP - 1                                       # channel carrying 1.0 -> pooling count
META_COL0 = SURFEL_CHANNELS                            # meta block lives at x[:, 8:16]


# ---------- Pallas kernel 1: fused nn.Linear + meta stack + count channel ----------
def _embed_stack_kernel(x_ref, w_ref, b_ref, o_ref):
    a = x_ref[...].astype(w_ref.dtype)                    # bf16 MXU operands (f32 acc)
    o_ref[...] = (
        jnp.dot(a, w_ref[...], preferred_element_type=jnp.float32) + b_ref[...]
    ).astype(o_ref.dtype)


def embed_and_stack(x, w_emb, b_emb, *, tm=4096, out_dtype=jnp.bfloat16):
    """x: (N, IN_CH) f32 -> (N, CP) lane-dense `out_dtype`, where
       [:, :35]   = x @ w_emb + b_emb          (nn.Linear(in_ch, 35, bias=True))
       [:, 35:43] = x[:, 8:16]                 (_stack_features meta block)
       [:, 43:127]= 0,  [:, 127] = 1.0         (pool-count carrier channel)."""
    n = x.shape[0]
    is_bf16 = out_dtype == jnp.bfloat16
    mxu_dtype = jnp.bfloat16 if is_bf16 else jnp.float32
    out_itemsize = 2 if is_bf16 else 4

    # Augmented parameters (built once per call in the wrapper, tiny):
    w_aug = jnp.zeros((IN_CH, CP), jnp.float32)
    w_aug = w_aug.at[:, :EMBEDDINGS_LENGTH].set(w_emb)
    w_aug = w_aug.at[META_COL0:META_COL0 + META_FEATURES,
                     EMBEDDINGS_LENGTH:STACKED_CH].set(jnp.eye(META_FEATURES, dtype=jnp.float32))
    w_aug = w_aug.astype(mxu_dtype)
    b_aug = jnp.zeros((1, CP), jnp.float32)
    b_aug = b_aug.at[0, :EMBEDDINGS_LENGTH].set(b_emb)
    b_aug = b_aug.at[0, ONES_CH].set(1.0)

    # Don't over-tile tiny point counts; keep the block sublane-aligned (multiple of 8).
    tm = max(8, min(tm, ((n + 7) // 8) * 8))
    grid = (pl.cdiv(n, tm),)                           # ragged final block: no pad / no slice

    return pl.pallas_call(
        _embed_stack_kernel,
        grid=grid,
        in_specs=[
            pl.BlockSpec((tm, IN_CH), lambda i: (i, 0)),
            pl.BlockSpec((IN_CH, CP), lambda i: (0, 0)),
            pl.BlockSpec((1, CP), lambda i: (0, 0)),
        ],
        out_specs=pl.BlockSpec((tm, CP), lambda i: (i, 0)),
        out_shape=jax.ShapeDtypeStruct((n, CP), out_dtype),
        compiler_params=pltpu.CompilerParams(dimension_semantics=("parallel",)),
        cost_estimate=pl.CostEstimate(
            flops=2 * n * IN_CH * CP,
            transcendentals=0,
            bytes_accessed=(n * IN_CH * 4 + IN_CH * CP * out_itemsize + CP * 4
                            + n * CP * out_itemsize)),
    )(x, w_aug, b_aug)


# --------- Pallas kernel 2: masked avg pooling (sum-pool / clamp(count, 1)) ---------
def _masked_avgpool_kernel(x_ref, o_ref):
    # x_ref: (1, th, n, W, n*CP)   o_ref: (1, th, W, CP)
    nsub = x_ref.shape[2]
    cp = o_ref.shape[-1]
    x = x_ref[0].astype(jnp.float32)               # widen bf16 -> f32 (v5e VPU has no bf16)
    rows = x[:, 0]                                 # leading-dim index: cheap
    for r in range(1, nsub):
        rows = rows + x[:, r]                      # (th, W, n*CP)
    s = rows[:, :, :cp]                            # 128-aligned lane slices: cheap
    for c in range(1, nsub):
        s = s + rows[:, :, c * cp:(c + 1) * cp]    # (th, W, CP) sum over n x n window
    cnt = jnp.maximum(s[:, :, ONES_CH:ONES_CH + 1], 1.0)   # ones-channel == window count
    o_ref[0] = s / cnt                             # exact divide (counts are small ints)


def _pick_th(h, b, row_bytes_in, target_bytes=2 << 20, min_steps=4):
    """Largest divisor of h whose input block stays <= ~2 MiB, shrunk until the grid has
    enough steps to pipeline DMAs and feed both v7x TensorCores."""
    divisors = [d for d in range(1, h + 1) if h % d == 0]
    fitting = [d for d in divisors if d * row_bytes_in <= target_bytes] or [1]
    th = fitting[-1]
    while th > 1 and b * (h // th) < min_steps:
        smaller = [d for d in fitting if d < th]
        if not smaller:
            break
        th = smaller[-1]
    return th


def masked_avg_pooling(fmap_padded, *, th=None):
    """fmap_padded: (B, Hu, Wu, CP) NHWC, channel ONES_CH == 1.0 at masked pixels.
    Returns (B, H, W, CP) f32: sum-pool(n,n,stride=n) / clamp(mask count, 1)."""
    b, hu, wu, cp = fmap_padded.shape
    n = N_SUB_PIXELS
    h, w = hu // n, wu // n
    itemsize = fmap_padded.dtype.itemsize
    if th is None:
        th = _pick_th(h, b, row_bytes_in=n * w * n * cp * itemsize)
    # Free (metadata-only) row-major reshape — no transpose, no extra HBM materialization.
    x = fmap_padded.reshape(b, h, n, w, n * cp)
    return pl.pallas_call(
        _masked_avgpool_kernel,
        grid=(b, h // th),
        in_specs=[pl.BlockSpec((1, th, n, w, n * cp), lambda bi, hi: (bi, hi, 0, 0, 0))],
        out_specs=pl.BlockSpec((1, th, w, cp), lambda bi, hi: (bi, hi, 0, 0)),
        out_shape=jax.ShapeDtypeStruct((b, h, w, cp), jnp.float32),
        compiler_params=pltpu.CompilerParams(
            dimension_semantics=("parallel", "parallel")),
        cost_estimate=pl.CostEstimate(
            flops=4 * b * h * w * cp,
            transcendentals=0,
            bytes_accessed=b * hu * wu * cp * itemsize + 4 * b * h * w * cp),
    )(x)


# ------------------------------- plain-JAX glue ------------------------------------
def features2image_format(feats, points_mask_b1hw):
    """PyTorch: zeros(B,H,W,C); out[mask] = feats; (NCHW permute folded away — NHWC kept).
    jnp.nonzero runs eagerly, so N must be static per mask (cannot jit this wrapper)."""
    # TODO(synk): a segment-sum over coarse-pixel ids (b, hu//n, wu//n) would remove this
    # dense zero-padded scatter AND the pooling pass entirely (the single biggest win at
    # real resolutions); the dense path is kept to mirror the module structure.
    b, _, h, w = points_mask_b1hw.shape
    c = feats.shape[-1]
    m = points_mask_b1hw.reshape(b, h, w)
    bi, hi, wi = jnp.nonzero(m)
    out = jnp.zeros((b, h, w, c), feats.dtype)
    return out.at[bi, hi, wi].set(feats)


# --------------------------------- demo forward ------------------------------------
if __name__ == "__main__":
    key = jax.random.PRNGKey(0)
    ks = jax.random.split(key, 9)
    B = 2
    Hu, Wu = UPSAMPLED_RES
    H, W = IMAGE_RES

    # deterministic points_mask (B, 1, Hu, Wu); eager so N is static
    points_mask = jax.random.uniform(ks[0], (B, 1, Hu, Wu)) > 0.3
    N = int(points_mask.sum())

    # per-point inputs (what scene.read_average / frame would produce)
    features = jax.random.normal(ks[1], (N, SURFEL_CHANNELS), jnp.float32)
    confidence = jax.random.uniform(ks[2], (N, 1), dtype=jnp.float32)
    normals = jax.random.normal(ks[3], (N, 3), jnp.float32)
    ray_dirs = jax.random.normal(ks[4], (N, 3), jnp.float32)
    depth = jax.random.uniform(ks[5], (N, 1), dtype=jnp.float32)
    image = jax.random.uniform(ks[6], (N, 3), dtype=jnp.float32)

    # embedding_layer parameters: nn.Linear(IN_CH, EMBEDDINGS_LENGTH, bias=True)
    w_emb = jax.random.normal(ks[7], (IN_CH, EMBEDDINGS_LENGTH), jnp.float32) * 0.1
    b_emb = jax.random.normal(ks[8], (EMBEDDINGS_LENGTH,), jnp.float32) * 0.01

    # ---- fuse() path input: _stack_features(features, conf, normals, ray, depth) + image ----
    x = jnp.concatenate([features, confidence, normals, ray_dirs, depth, image], axis=-1)
    assert x.shape[-1] == IN_CH

    # ---- Pallas kernel 1: fused embedding + meta stack + count channel (bf16 out) ----
    stacked_p = embed_and_stack(x, w_emb, b_emb)          # (N, 128) lane-dense bf16
    emb = stacked_p[:, :EMBEDDINGS_LENGTH].astype(jnp.float32)   # embedding_layer output
    # TODO(synk): NeuralFeatureFusion / FeatureCompressor / scene.fuse are not provided in
    # the reference source, so the fuse path stops at the embeddings.

    # ---- _render() path: image-format scatter + masked pooling ----
    # TODO(synk): FeatureCompressor.extract is undefined; embeddings are used directly here.
    fmap_p = features2image_format(stacked_p, points_mask)   # (B, Hu, Wu, 128) NHWC bf16
    pooled_p = masked_avg_pooling(fmap_p)                    # Pallas kernel 2, f32 out
    pooled = pooled_p[..., :STACKED_CH]                      # (B, H, W, 43) real channels
    # TODO(synk): FeatureRefiner / FeatureMapDecoder definitions are not provided.

    # ---- correctness check against a pure-JAX f32 reference (bf16 intermediate => loose tol) ----
    emb_ref = x @ w_emb + b_emb
    meta_ref = jnp.concatenate([confidence, normals, ray_dirs, depth], axis=-1)
    stacked_ref = jnp.concatenate([emb_ref, meta_ref], axis=-1)
    fmap_ref = features2image_format(stacked_ref, points_mask)          # (B, Hu, Wu, 43) f32
    mask_f = points_mask.reshape(B, Hu, Wu, 1).astype(jnp.float32)
    n = N_SUB_PIXELS
    sums_ref = fmap_ref.reshape(B, H, n, W, n, -1).sum(axis=(2, 4))
    cnts_ref = mask_f.reshape(B, H, n, W, n, 1).sum(axis=(2, 4))
    pooled_ref = sums_ref / jnp.maximum(cnts_ref, 1.0)

    jax.block_until_ready((stacked_p, pooled_p))
    assert jnp.allclose(emb, emb_ref, rtol=2e-2, atol=3e-2)
    assert jnp.allclose(
        stacked_p[:, EMBEDDINGS_LENGTH:STACKED_CH].astype(jnp.float32),
        meta_ref, rtol=1e-2, atol=2e-2)
    assert jnp.allclose(pooled, pooled_ref, rtol=2e-2, atol=5e-2)
    print("KERNEL_OK")
</pallas_src>

<mosaic_0001>
module attributes {stable_mosaic.version = 11 : i64} {
  func.func @_embed_stack_kernel(%arg0: i32, %arg1: memref<1416x19xf32, #tpu.memory_space<vmem>>, %arg2: memref<19x128xbf16, #tpu.memory_space<vmem>>, %arg3: memref<1x128xf32, #tpu.memory_space<vmem>>, %arg4: memref<1416x128xbf16, #tpu.memory_space<vmem>>) attributes {dimension_semantics = [#tpu.dimension_semantics<parallel>], iteration_bounds = array<i64: 1>, scalar_prefetch = 0 : i64, scratch_operands = 0 : i64, tpu.core_type = #tpu.core_type<tc>, window_params = [{transform_indices = @transform_0, window_bounds = array<i64: 1416, 19>}, {pipeline_mode = #tpu.pipeline_mode<synchronous>, transform_indices = @transform_1, window_bounds = array<i64: 19, 128>}, {pipeline_mode = #tpu.pipeline_mode<synchronous>, transform_indices = @transform_2, window_bounds = array<i64: 1, 128>}, {transform_indices = @transform_3, window_bounds = array<i64: 1416, 128>}]} {
    %c0 = arith.constant 0 : index
    %c0_0 = arith.constant 0 : index
    %0 = vector.load %arg1[%c0, %c0_0] : memref<1416x19xf32, #tpu.memory_space<vmem>>, vector<1416x19xf32>
    %1 = arith.truncf %0 : vector<1416x19xf32> to vector<1416x19xbf16>
    %c0_1 = arith.constant 0 : index
    %c0_2 = arith.constant 0 : index
    %2 = vector.load %arg2[%c0_1, %c0_2] : memref<19x128xbf16, #tpu.memory_space<vmem>>, vector<19x128xbf16>
    %cst = arith.constant dense<0.000000e+00> : vector<1416x128xf32>
    %3 = tpu.matmul %1, %2, %cst {dimension_numbers = #tpu.dot_dimension_numbers<[1], [0], [0], [1], [0, 0, 1, 1], [], []>} : vector<1416x19xbf16>, vector<19x128xbf16>, vector<1416x128xf32> -> vector<1416x128xf32>
    %c0_3 = arith.constant 0 : index
    %c0_4 = arith.constant 0 : index
    %4 = vector.load %arg3[%c0_3, %c0_4] : memref<1x128xf32, #tpu.memory_space<vmem>>, vector<1x128xf32>
    %5 = vector.broadcast %4 : vector<1x128xf32> to vector<1416x128xf32>
    %6 = arith.addf %3, %5 : vector<1416x128xf32>
    %7 = arith.truncf %6 : vector<1416x128xf32> to vector<1416x128xbf16>
    %c0_5 = arith.constant 0 : index
    %c0_6 = arith.constant 0 : index
    %8 = vector.load %arg4[%c0_5, %c0_6] : memref<1416x128xbf16, #tpu.memory_space<vmem>>, vector<1416x128xbf16>
    tpu.vector_store %arg4[%c0_5, %c0_6], %7 {strides = array<i32>} : memref<1416x128xbf16, #tpu.memory_space<vmem>>, vector<1416x128xbf16>,
    return
  }
  func.func @transform_0(%arg0: i32) -> (i32, i32) {
    %c0_i32 = arith.constant 0 : i32
    %c0_i32_0 = arith.constant 0 : i32
    return %arg0, %c0_i32 : i32, i32
  }
  func.func @transform_1(%arg0: i32) -> (i32, i32) {
    %c0_i32 = arith.constant 0 : i32
    %c0_i32_0 = arith.constant 0 : i32
    %c0_i32_1 = arith.constant 0 : i32
    return %c0_i32, %c0_i32_0 : i32, i32
  }
  func.func @transform_2(%arg0: i32) -> (i32, i32) {
    %c0_i32 = arith.constant 0 : i32
    %c0_i32_0 = arith.constant 0 : i32
    %c0_i32_1 = arith.constant 0 : i32
    return %c0_i32, %c0_i32_0 : i32, i32
  }
  func.func @transform_3(%arg0: i32) -> (i32, i32) {
    %c0_i32 = arith.constant 0 : i32
    %c0_i32_0 = arith.constant 0 : i32
    return %arg0, %c0_i32 : i32, i32
  }
}

</mosaic_0001>

<llo_original>
// kernel: tpu_custom_call.1
$region0: #{tpu_custom_call.1}
  #allocation0 [shape = 'u32[]', space=smem, size = 0x4, offset = 0x4, fixed_abs, tag = 'smem constant byte address 0x4 - core index']
  #allocation1 [shape = 'u32[144,128]{1,0:T(1,128)}', space=vmem, size = 0x12000, scoped, tag = 'internal scratch']
  %s0 = inlined_call_operand.vmem [shape: f32[1410,19], index: 0, kind: input, shape index: {}]
  %s1 = inlined_call_operand.vmem [shape: bf16[19,128], index: 1, kind: input, shape index: {}]
  %s2 = inlined_call_operand.vmem [shape: f32[1,128], index: 2, kind: input, shape index: {}]
  %s3 = inlined_call_operand.hbm [shape: bf16[1410,128], index: 3, kind: output, shape index: {}]
  %s4 = sld [smem:[#allocation0]]
  $region22: #{tpu_custom_call.1} parent=0
    _
  %s6 = ssub.s32 1, %s4
  %s7 = scalar_select 0, %s6, %s4
  $region1: #{tpu_custom_call.1} parent=0
    #allocation2 [shape = 'u8[362496]{0}', space=vmem, size = 0x58800, scoped, tag = 'output window, operand 0, single buffered']
    #allocation3 [shape = 's32[1]{0}', space=sflag, size = 0x4, scoped, tag = 'scoped memory for tpu_custom_call.1']
    %8 = vsyncpa [#allocation3], 0
    // Predicated region
    $region2: #{tpu_custom_call.1} parent=1 // pred_check
      _
    $region3: #{tpu_custom_call.1} parent=1 // pred_check_branch
      %10 = sbr.rel (0) target = $region5
    $region4: #{tpu_custom_call.1} parent=1 // pred_region
      _
    $region5: #{tpu_custom_call.1} parent=1 // pred_fallthru
      _
    // Predicated region
    $region6: #{tpu_custom_call.1} parent=1 // pred_check
      _
    $region7: #{tpu_custom_call.1} parent=1 // pred_check_branch
      %12 = sbr.rel (0) target = $region9
    $region8: #{tpu_custom_call.1} parent=1 // pred_region
      _
    $region9: #{tpu_custom_call.1} parent=1 // pred_fallthru
      _
    // Predicated region
    $region10: #{tpu_custom_call.1} parent=1 // pred_check
      _
    $region11: #{tpu_custom_call.1} parent=1 // pred_check_branch
      %14 = sbr.rel (0) target = $region13
    $region12: #{tpu_custom_call.1} parent=1 // pred_region
      _
    $region13: #{tpu_custom_call.1} parent=1 // pred_fallthru
      _
    %v16 = vld [vmem:[%s0] sm:$0xff]
    %v17 = vld [vmem:[%s0 + $0x8] sm:$0xff]
    %v18 = vld [vmem:[%s0 + $0x10] sm:$0xff]
    %v19 = vld [vmem:[%s0 + $0x18] sm:$0xff]
    %v20 = vld [vmem:[%s0 + $0x20] sm:$0xff]
    %v21 = vld [vmem:[%s0 + $0x28] sm:$0xff]
    %v22 = vld [vmem:[%s0 + $0x30] sm:$0xff]
    %v23 = vld [vmem:[%s0 + $0x38] sm:$0xff]
    %v24 = vld [vmem:[%s0 + $0x40] sm:$0xff]
    %v25 = vld [vmem:[%s0 + $0x48] sm:$0xff]
    %v26 = vld [vmem:[%s0 + $0x50] sm:$0xff]
    %v27 = vld [vmem:[%s0 + $0x58] sm:$0xff]
    %v28 = vld [vmem:[%s0 + $0x60] sm:$0xff]
    %v29 = vld [vmem:[%s0 + $0x68] sm:$0xff]
    %v30 = vld [vmem:[%s0 + $0x70] sm:$0xff]
    %v31 = vld [vmem:[%s0 + $0x78] sm:$0xff]
    %v32 = vld [vmem:[%s0 + $0x80] sm:$0xff]
    %v33 = vld [vmem:[%s0 + $0x88] sm:$0xff]
    %v34 = vld [vmem:[%s0 + $0x90] sm:$0xff]
    %v35 = vld [vmem:[%s0 + $0x98] sm:$0xff]
    %v36 = vld [vmem:[%s0 + $0xa0] sm:$0xff]
    %v37 = vld [vmem:[%s0 + $0xa8] sm:$0xff]
    %v38 = vld [vmem:[%s0 + $0xb0] sm:$0xff]
    %v39 = vld [vmem:[%s0 + $0xb8] sm:$0xff]
    %v40 = vld [vmem:[%s0 + $0xc0] sm:$0xff]
    %v41 = vld [vmem:[%s0 + $0xc8] sm:$0xff]
    %v42 = vld [vmem:[%s0 + $0xd0] sm:$0xff]
    %v43 = vld [vmem:[%s0 + $0xd8] sm:$0xff]
    %v44 = vld [vmem:[%s0 + $0xe0] sm:$0xff]
    %v45 = vld [vmem:[%s0 + $0xe8] sm:$0xff]
    %v46 = vld [vmem:[%s0 + $0xf0] sm:$0xff]
    %v47 = vld [vmem:[%s0 + $0xf8] sm:$0xff]
    %v48 = vld [vmem:[%s0 + $0x100] sm:$0xff]
    %v49 = vld [vmem:[%s0 + $0x108] sm:$0xff]
    %v50 = vld [vmem:[%s0 + $0x110] sm:$0xff]
    %v51 = vld [vmem:[%s0 + $0x118] sm:$0xff]
    %v52 = vld [vmem:[%s0 + $0x120] sm:$0xff]
    %v53 = vld [vmem:[%s0 + $0x128] sm:$0xff]
    %v54 = vld [vmem:[%s0 + $0x130] sm:$0xff]
    %v55 = vld [vmem:[%s0 + $0x138] sm:$0xff]
    %v56 = vld [vmem:[%s0 + $0x140] sm:$0xff]
    %v57 = vld [vmem:[%s0 + $0x148] sm:$0xff]
    %v58 = vld [vmem:[%s0 + $0x150] sm:$0xff]
    %v59 = vld [vmem:[%s0 + $0x158] sm:$0xff]
    %v60 = vld [vmem:[%s0 + $0x160] sm:$0xff]
    %v61 = vld [vmem:[%s0 + $0x168] sm:$0xff]
    %v62 = vld [vmem:[%s0 + $0x170] sm:$0xff]
    %v63 = vld [vmem:[%s0 + $0x178] sm:$0xff]
    %v64 = vld [vmem:[%s0 + $0x180] sm:$0xff]
    %v65 = vld [vmem:[%s0 + $0x188] sm:$0xff]
    %v66 = vld [vmem:[%s0 + $0x190] sm:$0xff]
    %v67 = vld [vmem:[%s0 + $0x198] sm:$0xff]
    %v68 = vld [vmem:[%s0 + $0x1a0] sm:$0xff]
    %v69 = vld [vmem:[%s0 + $0x1a8] sm:$0xff]
    %v70 = vld [vmem:[%s0 + $0x1b0] sm:$0xff]
    %v71 = vld [vmem:[%s0 + $0x1b8] sm:$0xff]
    %v72 = vld [vmem:[%s0 + $0x1c0] sm:$0xff]
    %v73 = vld [vmem:[%s0 + $0x1c8] sm:$0xff]
    %v74 = vld [vmem:[%s0 + $0x1d0] sm:$0xff]
    %v75 = vld [vmem:[%s0 + $0x1d8] sm:$0xff]
    %v76 = vld [vmem:[%s0 + $0x1e0] sm:$0xff]
    %v77 = vld [vmem:[%s0 + $0x1e8] sm:$0xff]
    %v78 = vld [vmem:[%s0 + $0x1f0] sm:$0xff]
    %v79 = vld [vmem:[%s0 + $0x1f8] sm:$0xff]
    %v80 = vld [vmem:[%s0 + $0x200] sm:$0xff]
    %v81 = vld [vmem:[%s0 + $0x208] sm:$0xff]
    %v82 = vld [vmem:[%s0 + $0x210] sm:$0xff]
    %v83 = vld [vmem:[%s0 + $0x218] sm:$0xff]
    %v84 = vld [vmem:[%s0 + $0x220] sm:$0xff]
    %v85 = vld [vmem:[%s0 + $0x228] sm:$0xff]
    %v86 = vld [vmem:[%s0 + $0x230] sm:$0xff]
    %v87 = vld [vmem:[%s0 + $0x238] sm:$0xff]
    %v88 = vld [vmem:[%s0 + $0x240] sm:$0xff]
    %v89 = vld [vmem:[%s0 + $0x248] sm:$0xff]
    %v90 = vld [vmem:[%s0 + $0x250] sm:$0xff]
    %v91 = vld [vmem:[%s0 + $0x258] sm:$0xff]
    %v92 = vld [vmem:[%s0 + $0x260] sm:$0xff]
    %v93 = vld [vmem:[%s0 + $0x268] sm:$0xff]
    %v94 = vld [vmem:[%s0 + $0x270] sm:$0xff]
    %v95 = vld [vmem:[%s0 + $0x278] sm:$0xff]
    %v96 = vld [vmem:[%s0 + $0x280] sm:$0xff]
    %v97 = vld [vmem:[%s0 + $0x288] sm:$0xff]
    %v98 = vld [vmem:[%s0 + $0x290] sm:$0xff]
    %v99 = vld [vmem:[%s0 + $0x298] sm:$0xff]
    %v100 = vld [vmem:[%s0 + $0x2a0] sm:$0xff]
    %v101 = vld [vmem:[%s0 + $0x2a8] sm:$0xff]
    %v102 = vld [vmem:[%s0 + $0x2b0] sm:$0xff]
    %v103 = vld [vmem:[%s0 + $0x2b8] sm:$0xff]
    %v104 = vld [vmem:[%s0 + $0x2c0] sm:$0xff]
    %v105 = vld [vmem:[%s0 + $0x2c8] sm:$0xff]
    %v106 = vld [vmem:[%s0 + $0x2d0] sm:$0xff]
    %v107 = vld [vmem:[%s0 + $0x2d8] sm:$0xff]
    %v108 = vld [vmem:[%s0 + $0x2e0] sm:$0xff]
    %v109 = vld [vmem:[%s0 + $0x2e8] sm:$0xff]
    %v110 = vld [vmem:[%s0 + $0x2f0] sm:$0xff]
    %v111 = vld [vmem:[%s0 + $0x2f8] sm:$0xff]
    %v112 = vld [vmem:[%s0 + $0x300] sm:$0xff]
    %v113 = vld [vmem:[%s0 + $0x308] sm:$0xff]
    %v114 = vld [vmem:[%s0 + $0x310] sm:$0xff]
    %v115 = vld [vmem:[%s0 + $0x318] sm:$0xff]
    %v116 = vld [vmem:[%s0 + $0x320] sm:$0xff]
    %v117 = vld [vmem:[%s0 + $0x328] sm:$0xff]
    %v118 = vld [vmem:[%s0 + $0x330] sm:$0xff]
    %v119 = vld [vmem:[%s0 + $0x338] sm:$0xff]
    %v120 = vld [vmem:[%s0 + $0x340] sm:$0xff]
    %v121 = vld [vmem:[%s0 + $0x348] sm:$0xff]
    %v122 = vld [vmem:[%s0 + $0x350] sm:$0xff]
    %v123 = vld [vmem:[%s0 + $0x358] sm:$0xff]
    %v124 = vld [vmem:[%s0 + $0x360] sm:$0xff]
    %v125 = vld [vmem:[%s0 + $0x368] sm:$0xff]
    %v126 = vld [vmem:[%s0 + $0x370] sm:$0xff]
    %v127 = vld [vmem:[%s0 + $0x378] sm:$0xff]
    %v128 = vld [vmem:[%s0 + $0x380] sm:$0xff]
    %v129 = vld [vmem:[%s0 + $0x388] sm:$0xff]
    %v130 = vld [vmem:[%s0 + $0x390] sm:$0xff]
    %v131 = vld [vmem:[%s0 + $0x398] sm:$0xff]
    %v132 = vld [vmem:[%s0 + $0x3a0] sm:$0xff]
    %v133 = vld [vmem:[%s0 + $0x3a8] sm:$0xff]
    %v134 = vld [vmem:[%s0 + $0x3b0] sm:$0xff]
    %v135 = vld [vmem:[%s0 + $0x3b8] sm:$0xff]
    %v136 = vld [vmem:[%s0 + $0x3c0] sm:$0xff]
    %v137 = vld [vmem:[%s0 + $0x3c8] sm:$0xff]
    %v138 = vld [vmem:[%s0 + $0x3d0] sm:$0xff]
    %v139 = vld [vmem:[%s0 + $0x3d8] sm:$0xff]
    %v140 = vld [vmem:[%s0 + $0x3e0] sm:$0xff]
    %v141 = vld [vmem:[%s0 + $0x3e8] sm:$0xff]
    %v142 = vld [vmem:[%s0 + $0x3f0] sm:$0xff]
    %v143 = vld [vmem:[%s0 + $0x3f8] sm:$0xff]
    %v144 = vld [vmem:[%s0 + $0x400] sm:$0xff]
    %v145 = vld [vmem:[%s0 + $0x408] sm:$0xff]
    %v146 = vld [vmem:[%s0 + $0x410] sm:$0xff]
    %v147 = vld [vmem:[%s0 + $0x418] sm:$0xff]
    %v148 = vld [vmem:[%s0 + $0x420] sm:$0xff]
    %v149 = vld [vmem:[%s0 + $0x428] sm:$0xff]
    %v150 = vld [vmem:[%s0 + $0x430] sm:$0xff]
    %v151 = vld [vmem:[%s0 + $0x438] sm:$0xff]
    %v152 = vld [vmem:[%s0 + $0x440] sm:$0xff]
    %v153 = vld [vmem:[%s0 + $0x448] sm:$0xff]
    %v154 = vld [vmem:[%s0 + $0x450] sm:$0xff]
    %v155 = vld [vmem:[%s0 + $0x458] sm:$0xff]
    %v156 = vld [vmem:[%s0 + $0x460] sm:$0xff]
    %v157 = vld [vmem:[%s0 + $0x468] sm:$0xff]
    %v158 = vld [vmem:[%s0 + $0x470] sm:$0xff]
    %v159 = vld [vmem:[%s0 + $0x478] sm:$0xff]
    %v160 = vld [vmem:[%s0 + $0x480] sm:$0xff]
    %v161 = vld [vmem:[%s0 + $0x488] sm:$0xff]
    %v162 = vld [vmem:[%s0 + $0x490] sm:$0xff]
    %v163 = vld [vmem:[%s0 + $0x498] sm:$0xff]
    %v164 = vld [vmem:[%s0 + $0x4a0] sm:$0xff]
    %v165 = vld [vmem:[%s0 + $0x4a8] sm:$0xff]
    %v166 = vld [vmem:[%s0 + $0x4b0] sm:$0xff]
    %v167 = vld [vmem:[%s0 + $0x4b8] sm:$0xff]
    %v168 = vld [vmem:[%s0 + $0x4c0] sm:$0xff]
    %v169 = vld [vmem:[%s0 + $0x4c8] sm:$0xff]
    %v170 = vld [vmem:[%s0 + $0x4d0] sm:$0xff]
    %v171 = vld [vmem:[%s0 + $0x4d8] sm:$0xff]
    %v172 = vld [vmem:[%s0 + $0x4e0] sm:$0xff]
    %v173 = vld [vmem:[%s0 + $0x4e8] sm:$0xff]
    %v174 = vld [vmem:[%s0 + $0x4f0] sm:$0xff]
    %v175 = vld [vmem:[%s0 + $0x4f8] sm:$0xff]
    %v176 = vld [vmem:[%s0 + $0x500] sm:$0xff]
    %v177 = vld [vmem:[%s0 + $0x508] sm:$0xff]
    %v178 = vld [vmem:[%s0 + $0x510] sm:$0xff]
    %v179 = vld [vmem:[%s0 + $0x518] sm:$0xff]
    %v180 = vld [vmem:[%s0 + $0x520] sm:$0xff]
    %v181 = vld [vmem:[%s0 + $0x528] sm:$0xff]
    %v182 = vld [vmem:[%s0 + $0x530] sm:$0xff]
    %v183 = vld [vmem:[%s0 + $0x538] sm:$0xff]
    %v184 = vld [vmem:[%s0 + $0x540] sm:$0xff]
    %v185 = vld [vmem:[%s0 + $0x548] sm:$0xff]
    %v186 = vld [vmem:[%s0 + $0x550] sm:$0xff]
    %v187 = vld [vmem:[%s0 + $0x558] sm:$0xff]
    %v188 = vld [vmem:[%s0 + $0x560] sm:$0xff]
    %v189 = vld [vmem:[%s0 + $0x568] sm:$0xff]
    %v190 = vld [vmem:[%s0 + $0x570] sm:$0xff]
    %v191 = vld [vmem:[%s0 + $0x578] sm:$0xff]
    %v192 = vld [vmem:[%s0 + $0x580] sm:$0xff]
    %v193 = vpack.c.bf16 %v17, %v16
    %v194 = vpack.c.bf16 %v19, %v18
    %v195 = vpack.c.bf16 %v21, %v20
    %v196 = vpack.c.bf16 %v23, %v22
    %v197 = vpack.c.bf16 %v25, %v24
    %v198 = vpack.c.bf16 %v27, %v26
    %v199 = vpack.c.bf16 %v29, %v28
    %v200 = vpack.c.bf16 %v31, %v30
    %v201 = vpack.c.bf16 %v33, %v32
    %v202 = vpack.c.bf16 %v35, %v34
    %v203 = vpack.c.bf16 %v37, %v36
    %v204 = vpack.c.bf16 %v39, %v38
    %v205 = vpack.c.bf16 %v41, %v40
    %v206 = vpack.c.bf16 %v43, %v42
    %v207 = vpack.c.bf16 %v45, %v44
    %v208 = vpack.c.bf16 %v47, %v46
    %v209 = vpack.c.bf16 %v49, %v48
    %v210 = vpack.c.bf16 %v51, %v50
    %v211 = vpack.c.bf16 %v53, %v52
    %v212 = vpack.c.bf16 %v55, %v54
    %v213 = vpack.c.bf16 %v57, %v56
    %v214 = vpack.c.bf16 %v59, %v58
    %v215 = vpack.c.bf16 %v61, %v60
    %v216 = vpack.c.bf16 %v63, %v62
    %v217 = vpack.c.bf16 %v65, %v64
    %v218 = vpack.c.bf16 %v67, %v66
    %v219 = vpack.c.bf16 %v69, %v68
    %v220 = vpack.c.bf16 %v71, %v70
    %v221 = vpack.c.bf16 %v73, %v72
    %v222 = vpack.c.bf16 %v75, %v74
    %v223 = vpack.c.bf16 %v77, %v76
    %v224 = vpack.c.bf16 %v79, %v78
    %v225 = vpack.c.bf16 %v81, %v80
    %v226 = vpack.c.bf16 %v83, %v82
    %v227 = vpack.c.bf16 %v85, %v84
    %v228 = vpack.c.bf16 %v87, %v86
    %v229 = vpack.c.bf16 %v89, %v88
    %v230 = vpack.c.bf16 %v91, %v90
    %v231 = vpack.c.bf16 %v93, %v92
    %v232 = vpack.c.bf16 %v95, %v94
    %v233 = vpack.c.bf16 %v97, %v96
    %v234 = vpack.c.bf16 %v99, %v98
    %v235 = vpack.c.bf16 %v101, %v100
    %v236 = vpack.c.bf16 %v103, %v102
    %v237 = vpack.c.bf16 %v105, %v104
    %v238 = vpack.c.bf16 %v107, %v106
    %v239 = vpack.c.bf16 %v109, %v108
    %v240 = vpack.c.bf16 %v111, %v110
    %v241 = vpack.c.bf16 %v113, %v112
    %v242 = vpack.c.bf16 %v115, %v114
    %v243 = vpack.c.bf16 %v117, %v116
    %v244 = vpack.c.bf16 %v119, %v118
    %v245 = vpack.c.bf16 %v121, %v120
    %v246 = vpack.c.bf16 %v123, %v122
    %v247 = vpack.c.bf16 %v125, %v124
    %v248 = vpack.c.bf16 %v127, %v126
    %v249 = vpack.c.bf16 %v129, %v128
    %v250 = vpack.c.bf16 %v131, %v130
    %v251 = vpack.c.bf16 %v133, %v132
    %v252 = vpack.c.bf16 %v135, %v134
    %v253 = vpack.c.bf16 %v137, %v136
    %v254 = vpack.c.bf16 %v139, %v138
    %v255 = vpack.c.bf16 %v141, %v140
    %v256 = vpack.c.bf16 %v143, %v142
    %v257 = vpack.c.bf16 %v145, %v144
    %v258 = vpack.c.bf16 %v147, %v146
    %v259 = vpack.c.bf16 %v149, %v148
    %v260 = vpack.c.bf16 %v151, %v150
    %v261 = vpack.c.bf16 %v153, %v152
    %v262 = vpack.c.bf16 %v155, %v154
    %v263 = vpack.c.bf16 %v157, %v156
    %v264 = vpack.c.bf16 %v159, %v158
    %v265 = vpack.c.bf16 %v161, %v160
    %v266 = vpack.c.bf16 %v163, %v162
    %v267 = vpack.c.bf16 %v165, %v164
    %v268 = vpack.c.bf16 %v167, %v166
    %v269 = vpack.c.bf16 %v169, %v168
    %v270 = vpack.c.bf16 %v171, %v170
    %v271 = vpack.c.bf16 %v173, %v172
    %v272 = vpack.c.bf16 %v175, %v174
    %v273 = vpack.c.bf16 %v177, %v176
    %v274 = vpack.c.bf16 %v179, %v178
    %v275 = vpack.c.bf16 %v181, %v180
    %v276 = vpack.c.bf16 %v183, %v182
    %v277 = vpack.c.bf16 %v185, %v184
    %v278 = vpack.c.bf16 %v187, %v186
    %v279 = vpack.c.bf16 %v189, %v188
    %v280 = vpack.c.bf16 %v191, %v190
    %v281 = vpack.c.bf16 %v192, %v192
    %v282 = vld [vmem:[%s1] sm:$0xf]
    %v283 = vld [vmem:[%s1 + $0x4] sm:$0xf]
    %v284 = vld [vmem:[%s1 + $0x8] sm:$0x3]
    %v285 = vld [vmem:[%s2] sm:$0x1]
    %v287 = vlaneseq
    %v288 = vshrl.u32 %v287, 7
    %v289 = vsub.s32 0, %v288
    %v290 = vrot.slane %v285, %v289
    %v295 = vunpack.c.l.b16 %v282
    %v296 = vunpack.c.l.b16 %v283
    %v297 = vunpack.c.l.b16 %v284
    %v298 = vpack.c.b16 %v296, %v295
    %v299 = vpack.c.b16 %v297, %v297
    %vm301 = vcmask 154624
    %v303 = vsel %vm301, %v193, 0
    %v306 = vsel %vm301, %v194, 0
    %v309 = vsel %vm301, %v195, 0
    %v312 = vsel %vm301, %v196, 0
    %v315 = vsel %vm301, %v197, 0
    %v318 = vsel %vm301, %v198, 0
    %v321 = vsel %vm301, %v199, 0
    %v324 = vsel %vm301, %v200, 0
    %v327 = vsel %vm301, %v201, 0
    %v330 = vsel %vm301, %v202, 0
    %v333 = vsel %vm301, %v203, 0
    %v336 = vsel %vm301, %v204, 0
    %v339 = vsel %vm301, %v205, 0
    %v342 = vsel %vm301, %v206, 0
    %v345 = vsel %vm301, %v207, 0
    %v348 = vsel %vm301, %v208, 0
    %v351 = vsel %vm301, %v209, 0
    %v354 = vsel %vm301, %v210, 0
    %v357 = vsel %vm301, %v211, 0
    %v360 = vsel %vm301, %v212, 0
    %v363 = vsel %vm301, %v213, 0
    %v366 = vsel %vm301, %v214, 0
    %v369 = vsel %vm301, %v215, 0
    %v372 = vsel %vm301, %v216, 0
    %v375 = vsel %vm301, %v217, 0
    %v378 = vsel %vm301, %v218, 0
    %v381 = vsel %vm301, %v219, 0
    %v384 = vsel %vm301, %v220, 0
    %v387 = vsel %vm301, %v221, 0
    %v390 = vsel %vm301, %v222, 0
    %v393 = vsel %vm301, %v223, 0
    %v396 = vsel %vm301, %v224, 0
    %v399 = vsel %vm301, %v225, 0
    %v402 = vsel %vm301, %v226, 0
    %v405 = vsel %vm301, %v227, 0
    %v408 = vsel %vm301, %v228, 0
    %v411 = vsel %vm301, %v229, 0
    %v414 = vsel %vm301, %v230, 0
    %v417 = vsel %vm301, %v231, 0
    %v420 = vsel %vm301, %v232, 0
    %v423 = vsel %vm301, %v233, 0
    %v426 = vsel %vm301, %v234, 0
    %v429 = vsel %vm301, %v235, 0
    %v432 = vsel %vm301, %v236, 0
    %v435 = vsel %vm301, %v237, 0
    %v438 = vsel %vm301, %v238, 0
    %v441 = vsel %vm301, %v239, 0
    %v444 = vsel %vm301, %v240, 0
    %v447 = vsel %vm301, %v241, 0
    %v450 = vsel %vm301, %v242, 0
    %v453 = vsel %vm301, %v243, 0
    %v456 = vsel %vm301, %v244, 0
    %v459 = vsel %vm301, %v245, 0
    %v462 = vsel %vm301, %v246, 0
    %v465 = vsel %vm301, %v247, 0
    %v468 = vsel %vm301, %v248, 0
    %v471 = vsel %vm301, %v249, 0
    %v474 = vsel %vm301, %v250, 0
    %v477 = vsel %vm301, %v251, 0
    %v480 = vsel %vm301, %v252, 0
    %v483 = vsel %vm301, %v253, 0
    %v486 = vsel %vm301, %v254, 0
    %v489 = vsel %vm301, %v255, 0
    %v492 = vsel %vm301, %v256, 0
    %v495 = vsel %vm301, %v257, 0
    %v498 = vsel %vm301, %v258, 0
    %v501 = vsel %vm301, %v259, 0
    %v504 = vsel %vm301, %v260, 0
    %v507 = vsel %vm301, %v261, 0
    %v510 = vsel %vm301, %v262, 0
    %v513 = vsel %vm301, %v263, 0
    %v516 = vsel %vm301, %v264, 0
    %v519 = vsel %vm301, %v265, 0
    %v522 = vsel %vm301, %v266, 0
    %v525 = vsel %vm301, %v267, 0
    %v528 = vsel %vm301, %v268, 0
    %v531 = vsel %vm301, %v269, 0
    %v534 = vsel %vm301, %v270, 0
    %v537 = vsel %vm301, %v271, 0
    %v540 = vsel %vm301, %v272, 0
    %v543 = vsel %vm301, %v273, 0
    %v546 = vsel %vm301, %v274, 0
    %v549 = vsel %vm301, %v275, 0
    %v552 = vsel %vm301, %v276, 0
    %v555 = vsel %vm301, %v277, 0
    %v558 = vsel %vm301, %v278, 0
    %v561 = vsel %vm301, %v279, 0
    %v564 = vsel %vm301, %v280, 0
    %v567 = vsel %vm301, %v281, 0
    %vm569 = vcmask 1040384
    %vm570 = vcmask 1041408
    %v571 = vsel %vm569, 4294967295, 65535
    %v572 = vsel %vm570, %v571, 0
    %v574 = vand.u32 %v299, %v572
    %576 = vmatprep.subr.bf16.mxu0 0
    %577 = vmatpush1.bf16.msra.mxu0 %v298
    %578 = vmatprep.subr.bf16.mxu0 0
    %579 = vmatpush1.bf16.msra.mxu0 %v574
    %580 = vmatprep.subr.bf16.mxu0 0
    %581 = vmatpush1.bf16.msra.mxu0 0
    %582 = vmatprep.subr.bf16.mxu0 0
    %583 = vmatpush1.bf16.msra.mxu0 0
    %584 = vmatprep.subr.bf16.mxu0 0
    %585 = vmatpush1.bf16.msra.mxu0 0
    %586 = vmatprep.subr.bf16.mxu0 0
    %587 = vmatpush1.bf16.msra.mxu0 0
    %588 = vmatprep.subr.bf16.mxu0 0
    %589 = vmatpush1.bf16.msra.mxu0 0
    %590 = vmatprep.subr.bf16.mxu0 0
    %591 = vmatpush1.bf16.msra.mxu0 0
    %592 = vmatprep.subr.bf16.mxu0 0
    %593 = vmatpush1.bf16.msra.mxu0 0
    %594 = vmatprep.subr.bf16.mxu0 0
    %595 = vmatpush1.bf16.msra.mxu0 0
    %596 = vmatprep.subr.bf16.mxu0 0
    %597 = vmatpush1.bf16.msra.mxu0 0
    %598 = vmatprep.subr.bf16.mxu0 0
    %599 = vmatpush1.bf16.msra.mxu0 0
    %600 = vmatprep.subr.bf16.mxu0 0
    %601 = vmatpush1.bf16.msra.mxu0 0
    %602 = vmatprep.subr.bf16.mxu0 0
    %603 = vmatpush1.bf16.msra.mxu0 0
    %604 = vmatprep.subr.bf16.mxu0 0
    %605 = vmatpush1.bf16.msra.mxu0 0
    %606 = vmatprep.subr.bf16.mxu0 0
    %607 = vmatpush1.bf16.msra.mxu0 0
    %608 = vmatprep.mubr.bf16.mxu0 0
    %609 = vmatmul.mubr.bf16.gmra.mrb[0].mxu0 %v303
    %v610 = vpop.f32.mrb[0].mxu0
    %v611 = vadd.f32 %v290, %v610
    %v612 = vpop.f32.mrb[0].mxu0
    %v613 = vpop.f32.mrb[0].mxu0
    %v614 = vadd.f32 %v290, %v613
    %v615 = vpop.f32.mrb[0].mxu0
    %616 = vmatprep.mubr.bf16.mxu0 0
    %617 = vmatmul.mubr.bf16.gmra.mrb[0].mxu0 %v306
    %v618 = vpop.f32.mrb[0].mxu0
    %v619 = vadd.f32 %v290, %v618
    %v620 = vpop.f32.mrb[0].mxu0
    %v621 = vpop.f32.mrb[0].mxu0
    %v622 = vadd.f32 %v290, %v621
    %v623 = vpop.f32.mrb[0].mxu0
    %624 = vmatprep.mubr.bf16.mxu0 0
    %625 = vmatmul.mubr.bf16.gmra.mrb[0].mxu0 %v309
    %v626 = vpop.f32.mrb[0].mxu0
    %v627 = vadd.f32 %v290, %v626
    %v628 = vpop.f32.mrb[0].mxu0
    %v629 = vpop.f32.mrb[0].mxu0
    %v630 = vadd.f32 %v290, %v629
    %v631 = vpop.f32.mrb[0].mxu0
    %632 = vmatprep.mubr.bf16.mxu0 0
    %633 = vmatmul.mubr.bf16.gmra.mrb[0].mxu0 %v312
    %v634 = vpop.f32.mrb[0].mxu0
    %v635 = vadd.f32 %v290, %v634
    %v636 = vpop.f32.mrb[0].mxu0
    %v637 = vpop.f32.mrb[0].mxu0
    %v638 = vadd.f32 %v290, %v637
    %v639 = vpop.f32.mrb[0].mxu0
    %640 = vmatprep.mubr.bf16.mxu0 0
    %641 = vmatmul.mubr.bf16.gmra.mrb[0].mxu0 %v315
    %v642 = vpop.f32.mrb[0].mxu0
    %v643 = vadd.f32 %v290, %v642
    %v644 = vpop.f32.mrb[0].mxu0
    %v645 = vpop.f32.mrb[0].mxu0
    %v646 = vadd.f32 %v290, %v645
    %v647 = vpop.f32.mrb[0].mxu0
    %648 = vmatprep.mubr.bf16.mxu0 0
    %649 = vmatmul.mubr.bf16.gmra.mrb[0].mxu0 %v318
    %v650 = vpop.f32.mrb[0].mxu0
    %v651 = vadd.f32 %v290, %v650
    %v652 = vpop.f32.mrb[0].mxu0
    %v653 = vpop.f32.mrb[0].mxu0
    %v654 = vadd.f32 %v290, %v653
    %v655 = vpop.f32.mrb[0].mxu0
    %656 = vmatprep.mubr.bf16.mxu0 0
    %657 = vmatmul.mubr.bf16.gmra.mrb[0].mxu0 %v321
    %v658 = vpop.f32.mrb[0].mxu0
    %v659 = vadd.f32 %v290, %v658
    %v660 = vpop.f32.mrb[0].mxu0
    %v661 = vpop.f32.mrb[0].mxu0
    %v662 = vadd.f32 %v290, %v661
    %v663 = vpop.f32.mrb[0].mxu0
    %664 = vmatprep.mubr.bf16.mxu0 0
    %665 = vmatmul.mubr.bf16.gmra.mrb[0].mxu0 %v324
    %v666 = vpop.f32.mrb[0].mxu0
    %v667 = vadd.f32 %v290, %v666
    %v668 = vpop.f32.mrb[0].mxu0
    %v669 = vpop.f32.mrb[0].mxu0
    %v670 = vadd.f32 %v290, %v669
    %v671 = vpop.f32.mrb[0].mxu0
    %672 = vmatprep.mubr.bf16.mxu0 0
    %673 = vmatmul.mubr.bf16.gmra.mrb[0].mxu0 %v327
    %v674 = vpop.f32.mrb[0].mxu0
    %v675 = vadd.f32 %v290, %v674
    %v676 = vpop.f32.mrb[0].mxu0
    %v677 = vpop.f32.mrb[0].mxu0
    %v678 = vadd.f32 %v290, %v677
    %v679 = vpop.f32.mrb[0].mxu0
    %680 = vmatprep.mubr.bf16.mxu0 0
    %681 = vmatmul.mubr.bf16.gmra.mrb[0].mxu0 %v330
    %v682 = vpop.f32.mrb[0].mxu0
    %v683 = vadd.f32 %v290, %v682
    %v684 = vpop.f32.mrb[0].mxu0
    %v685 = vpop.f32.mrb[0].mxu0
    %v686 = vadd.f32 %v290, %v685
    %v687 = vpop.f32.mrb[0].mxu0
    %688 = vmatprep.mubr.bf16.mxu0 0
    %689 = vmatmul.mubr.bf16.gmra.mrb[0].mxu0 %v333
    %v690 = vpop.f32.mrb[0].mxu0
    %v691 = vadd.f32 %v290, %v690
    %v692 = vpop.f32.mrb[0].mxu0
    %v693 = vpop.f32.mrb[0].mxu0
    %v694 = vadd.f32 %v290, %v693
    %v695 = vpop.f32.mrb[0].mxu0
    %696 = vmatprep.mubr.bf16.mxu0 0
    %697 = vmatmul.mubr.bf16.gmra.mrb[0].mxu0 %v336
    %v698 = vpop.f32.mrb[0].mxu0
    %v699 = vadd.f32 %v290, %v698
    %v700 = vpop.f32.mrb[0].mxu0
    %v701 = vpop.f32.mrb[0].mxu0
    %v702 = vadd.f32 %v290, %v701
    %v703 = vpop.f32.mrb[0].mxu0
    %704 = vmatprep.mubr.bf16.mxu0 0
    %705 = vmatmul.mubr.bf16.gmra.mrb[0].mxu0 %v339
    %v706 = vpop.f32.mrb[0].mxu0
    %v707 = vadd.f32 %v290, %v706
    %v708 = vpop.f32.mrb[0].mxu0
    %v709 = vpop.f32.mrb[0].mxu0
    %v710 = vadd.f32 %v290, %v709
    %v711 = vpop.f32.mrb[0].mxu0
    %712 = vmatprep.mubr.bf16.mxu0 0
    %713 = vmatmul.mubr.bf16.gmra.mrb[0].mxu0 %v342
    %v714 = vpop.f32.mrb[0].mxu0
    %v715 = vadd.f32 %v290, %v714
    %v716 = vpop.f32.mrb[0].mxu0
    %v717 = vpop.f32.mrb[0].mxu0
    %v718 = vadd.f32 %v290, %v717
    %v719 = vpop.f32.mrb[0].mxu0
    %720 = vmatprep.mubr.bf16.mxu0 0
    %721 = vmatmul.mubr.bf16.gmra.mrb[0].mxu0 %v345
    %v722 = vpop.f32.mrb[0].mxu0
    %v723 = vadd.f32 %v290, %v722
    %v724 = vpop.f32.mrb[0].mxu0
    %v725 = vpop.f32.mrb[0].mxu0
    %v726 = vadd.f32 %v290, %v725
    %v727 = vpop.f32.mrb[0].mxu0
    %728 = vmatprep.mubr.bf16.mxu0 0
    %729 = vmatmul.mubr.bf16.gmra.mrb[0].mxu0 %v348
    %v730 = vpop.f32.mrb[0].mxu0
    %v731 = vadd.f32 %v290, %v730
    %v732 = vpop.f32.mrb[0].mxu0
    %v733 = vpop.f32.mrb[0].mxu0
    %v734 = vadd.f32 %v290, %v733
    %v735 = vpop.f32.mrb[0].mxu0
    %736 = vmatprep.mubr.bf16.mxu0 0
    %737 = vmatmul.mubr.bf16.gmra.mrb[0].mxu0 %v351
    %v738 = vpop.f32.mrb[0].mxu0
    %v739 = vadd.f32 %v290, %v738
    %v740 = vpop.f32.mrb[0].mxu0
    %v741 = vpop.f32.mrb[0].mxu0
    %v742 = vadd.f32 %v290, %v741
    %v743 = vpop.f32.mrb[0].mxu0
    %744 = vmatprep.mubr.bf16.mxu0 0
    %745 = vmatmul.mubr.bf16.gmra.mrb[0].mxu0 %v354
    %v746 = vpop.f32.mrb[0].mxu0
    %v747 = vadd.f32 %v290, %v746
    %v748 = vpop.f32.mrb[0].mxu0
    %v749 = vpop.f32.mrb[0].mxu0
    %v750 = vadd.f32 %v290, %v749
    %v751 = vpop.f32.mrb[0].mxu0
    %752 = vmatprep.mubr.bf16.mxu0 0
    %753 = vmatmul.mubr.bf16.gmra.mrb[0].mxu0 %v357
    %v754 = vpop.f32.mrb[0].mxu0
    %v755 = vadd.f32 %v290, %v754
    %v756 = vpop.f32.mrb[0].mxu0
    %v757 = vpop.f32.mrb[0].mxu0
    %v758 = vadd.f32 %v290, %v757
    %v759 = vpop.f32.mrb[0].mxu0
    %760 = vmatprep.mubr.bf16.mxu0 0
    %761 = vmatmul.mubr.bf16.gmra.mrb[0].mxu0 %v360
    %v762 = vpop.f32.mrb[0].mxu0
    %v763 = vadd.f32 %v290, %v762
    %v764 = vpop.f32.mrb[0].mxu0
    %v765 = vpop.f32.mrb[0].mxu0
    %v766 = vadd.f32 %v290, %v765
    %v767 = vpop.f32.mrb[0].mxu0
    %768 = vmatprep.mubr.bf16.mxu0 0
    %769 = vmatmul.mubr.bf16.gmra.mrb[0].mxu0 %v363
    %v770 = vpop.f32.mrb[0].mxu0
    %v771 = vadd.f32 %v290, %v770
    %v772 = vpop.f32.mrb[0].mxu0
    %v773 = vpop.f32.mrb[0].mxu0
    %v774 = vadd.f32 %v290, %v773
    %v775 = vpop.f32.mrb[0].mxu0
    %776 = vmatprep.mubr.bf16.mxu0 0
    %777 = vmatmul.mubr.bf16.gmra.mrb[0].mxu0 %v366
    %v778 = vpop.f32.mrb[0].mxu0
    %v779 = vadd.f32 %v290, %v778
    %v780 = vpop.f32.mrb[0].mxu0
    %v781 = vpop.f32.mrb[0].mxu0
    %v782 = vadd.f32 %v290, %v781
    %v783 = vpop.f32.mrb[0].mxu0
    %784 = vmatprep.mubr.bf16.mxu0 0
    %785 = vmatmul.mubr.bf16.gmra.mrb[0].mxu0 %v369
    %v786 = vpop.f32.mrb[0].mxu0
    %v787 = vadd.f32 %v290, %v786
    %v788 = vpop.f32.mrb[0].mxu0
    %v789 = vpop.f32.mrb[0].mxu0
    %v790 = vadd.f32 %v290, %v789
    %v791 = vpop.f32.mrb[0].mxu0
    %792 = vmatprep.mubr.bf16.mxu0 0
    %793 = vmatmul.mubr.bf16.gmra.mrb[0].mxu0 %v372
    %v794 = vpop.f32.mrb[0].mxu0
    %v795 = vadd.f32 %v290, %v794
    %v796 = vpop.f32.mrb[0].mxu0
    %v797 = vpop.f32.mrb[0].mxu0
    %v798 = vadd.f32 %v290, %v797
    %v799 = vpop.f32.mrb[0].mxu0
    %800 = vmatprep.mubr.bf16.mxu0 0
    %801 = vmatmul.mubr.bf16.gmra.mrb[0].mxu0 %v375
    %v802 = vpop.f32.mrb[0].mxu0
    %v803 = vadd.f32 %v290, %v802
    %v804 = vpop.f32.mrb[0].mxu0
    %v805 = vpop.f32.mrb[0].mxu0
    %v806 = vadd.f32 %v290, %v805
    %v807 = vpop.f32.mrb[0].mxu0
    %808 = vmatprep.mubr.bf16.mxu0 0
    %809 = vmatmul.mubr.bf16.gmra.mrb[0].mxu0 %v378
    %v810 = vpop.f32.mrb[0].mxu0
    %v811 = vadd.f32 %v290, %v810
    %v812 = vpop.f32.mrb[0].mxu0
    %v813 = vpop.f32.mrb[0].mxu0
    %v814 = vadd.f32 %v290, %v813
    %v815 = vpop.f32.mrb[0].mxu0
    %816 = vmatprep.mubr.bf16.mxu0 0
    %817 = vmatmul.mubr.bf16.gmra.mrb[0].mxu0 %v381
    %v818 = vpop.f32.mrb[0].mxu0
    %v819 = vadd.f32 %v290, %v818
    %v820 = vpop.f32.mrb[0].mxu0
    %v821 = vpop.f32.mrb[0].mxu0
    %v822 = vadd.f32 %v290, %v821
    %v823 = vpop.f32.mrb[0].mxu0
    %824 = vmatprep.mubr.bf16.mxu0 0
    %825 = vmatmul.mubr.bf16.gmra.mrb[0].mxu0 %v384
    %v826 = vpop.f32.mrb[0].mxu0
    %v827 = vadd.f32 %v290, %v826
    %v828 = vpop.f32.mrb[0].mxu0
    %v829 = vpop.f32.mrb[0].mxu0
    %v830 = vadd.f32 %v290, %v829
    %v831 = vpop.f32.mrb[0].mxu0
    %832 = vmatprep.mubr.bf16.mxu0 0
    %833 = vmatmul.mubr.bf16.gmra.mrb[0].mxu0 %v387
    %v834 = vpop.f32.mrb[0].mxu0
    %v835 = vadd.f32 %v290, %v834
    %v836 = vpop.f32.mrb[0].mxu0
    %v837 = vpop.f32.mrb[0].mxu0
    %v838 = vadd.f32 %v290, %v837
    %v839 = vpop.f32.mrb[0].mxu0
    %840 = vmatprep.mubr.bf16.mxu0 0
    %841 = vmatmul.mubr.bf16.gmra.mrb[0].mxu0 %v390
    %v842 = vpop.f32.mrb[0].mxu0
    %v843 = vadd.f32 %v290, %v842
    %v844 = vpop.f32.mrb[0].mxu0
    %v845 = vpop.f32.mrb[0].mxu0
    %v846 = vadd.f32 %v290, %v845
    %v847 = vpop.f32.mrb[0].mxu0
    %848 = vmatprep.mubr.bf16.mxu0 0
    %849 = vmatmul.mubr.bf16.gmra.mrb[0].mxu0 %v393
    %v850 = vpop.f32.mrb[0].mxu0
    %v851 = vadd.f32 %v290, %v850
    %v852 = vpop.f32.mrb[0].mxu0
    %v853 = vpop.f32.mrb[0].mxu0
    %v854 = vadd.f32 %v290, %v853
    %v855 = vpop.f32.mrb[0].mxu0
    %856 = vmatprep.mubr.bf16.mxu0 0
    %857 = vmatmul.mubr.bf16.gmra.mrb[0].mxu0 %v396
    %v858 = vpop.f32.mrb[0].mxu0
    %v859 = vadd.f32 %v290, %v858
    %v860 = vpop.f32.mrb[0].mxu0
    %v861 = vpop.f32.mrb[0].mxu0
    %v862 = vadd.f32 %v290, %v861
    %v863 = vpop.f32.mrb[0].mxu0
    %864 = vmatprep.mubr.bf16.mxu0 0
    %865 = vmatmul.mubr.bf16.gmra.mrb[0].mxu0 %v399
    %v866 = vpop.f32.mrb[0].mxu0
    %v867 = vadd.f32 %v290, %v866
    %v868 = vpop.f32.mrb[0].mxu0
    %v869 = vpop.f32.mrb[0].mxu0
    %v870 = vadd.f32 %v290, %v869
    %v871 = vpop.f32.mrb[0].mxu0
    %872 = vmatprep.mubr.bf16.mxu0 0
    %873 = vmatmul.mubr.bf16.gmra.mrb[0].mxu0 %v402
    %v874 = vpop.f32.mrb[0].mxu0
    %v875 = vadd.f32 %v290, %v874
    %v876 = vpop.f32.mrb[0].mxu0
    %v877 = vpop.f32.mrb[0].mxu0
    %v878 = vadd.f32 %v290, %v877
    %v879 = vpop.f32.mrb[0].mxu0
    %880 = vmatprep.mubr.bf16.mxu0 0
    %881 = vmatmul.mubr.bf16.gmra.mrb[0].mxu0 %v405
    %v882 = vpop.f32.mrb[0].mxu0
    %v883 = vadd.f32 %v290, %v882
    %v884 = vpop.f32.mrb[0].mxu0
    %v885 = vpop.f32.mrb[0].mxu0
    %v886 = vadd.f32 %v290, %v885
    %v887 = vpop.f32.mrb[0].mxu0
    %888 = vmatprep.mubr.bf16.mxu0 0
    %889 = vmatmul.mubr.bf16.gmra.mrb[0].mxu0 %v408
    %v890 = vpop.f32.mrb[0].mxu0
    %v891 = vadd.f32 %v290, %v890
    %v892 = vpop.f32.mrb[0].mxu0
    %v893 = vpop.f32.mrb[0].mxu0
    %v894 = vadd.f32 %v290, %v893
    %v895 = vpop.f32.mrb[0].mxu0
    %896 = vmatprep.mubr.bf16.mxu0 0
    %897 = vmatmul.mubr.bf16.gmra.mrb[0].mxu0 %v411
    %v898 = vpop.f32.mrb[0].mxu0
    %v899 = vadd.f32 %v290, %v898
    %v900 = vpop.f32.mrb[0].mxu0
    %v901 = vpop.f32.mrb[0].mxu0
    %v902 = vadd.f32 %v290, %v901
    %v903 = vpop.f32.mrb[0].mxu0
    %904 = vmatprep.mubr.bf16.mxu0 0
    %905 = vmatmul.mubr.bf16.gmra.mrb[0].mxu0 %v414
    %v906 = vpop.f32.mrb[0].mxu0
    %v907 = vadd.f32 %v290, %v906
    %v908 = vpop.f32.mrb[0].mxu0
    %v909 = vpop.f32.mrb[0].mxu0
    %v910 = vadd.f32 %v290, %v909
    %v911 = vpop.f32.mrb[0].mxu0
    %912 = vmatprep.mubr.bf16.mxu0 0
    %913 = vmatmul.mubr.bf16.gmra.mrb[0].mxu0 %v417
    %v914 = vpop.f32.mrb[0].mxu0
    %v915 = vadd.f32 %v290, %v914
    %v916 = vpop.f32.mrb[0].mxu0
    %v917 = vpop.f32.mrb[0].mxu0
    %v918 = vadd.f32 %v290, %v917
    %v919 = vpop.f32.mrb[0].mxu0
    %920 = vmatprep.mubr.bf16.mxu0 0
    %921 = vmatmul.mubr.bf16.gmra.mrb[0].mxu0 %v420
    %v922 = vpop.f32.mrb[0].mxu0
    %v923 = vadd.f32 %v290, %v922
    %v924 = vpop.f32.mrb[0].mxu0
    %v925 = vpop.f32.mrb[0].mxu0
    %v926 = vadd.f32 %v290, %v925
    %v927 = vpop.f32.mrb[0].mxu0
    %928 = vmatprep.mubr.bf16.mxu0 0
    %929 = vmatmul.mubr.bf16.gmra.mrb[0].mxu0 %v423
    %v930 = vpop.f32.mrb[0].mxu0
    %v931 = vadd.f32 %v290, %v930
    %v932 = vpop.f32.mrb[0].mxu0
    %v933 = vpop.f32.mrb[0].mxu0
    %v934 = vadd.f32 %v290, %v933
    %v935 = vpop.f32.mrb[0].mxu0
    %936 = vmatprep.mubr.bf16.mxu0 0
    %937 = vmatmul.mubr.bf16.gmra.mrb[0].mxu0 %v426
    %v938 = vpop.f32.mrb[0].mxu0
    %v939 = vadd.f32 %v290, %v938
    %v940 = vpop.f32.mrb[0].mxu0
    %v941 = vpop.f32.mrb[0].mxu0
    %v942 = vadd.f32 %v290, %v941
    %v943 = vpop.f32.mrb[0].mxu0
    %944 = vmatprep.mubr.bf16.mxu0 0
    %945 = vmatmul.mubr.bf16.gmra.mrb[0].mxu0 %v429
    %v946 = vpop.f32.mrb[0].mxu0
    %v947 = vadd.f32 %v290, %v946
    %v948 = vpop.f32.mrb[0].mxu0
    %v949 = vpop.f32.mrb[0].mxu0
    %v950 = vadd.f32 %v290, %v949
    %v951 = vpop.f32.mrb[0].mxu0
    %952 = vmatprep.mubr.bf16.mxu0 0
    %953 = vmatmul.mubr.bf16.gmra.mrb[0].mxu0 %v432
    %v954 = vpop.f32.mrb[0].mxu0
    %v955 = vadd.f32 %v290, %v954
    %v956 = vpop.f32.mrb[0].mxu0
    %v957 = vpop.f32.mrb[0].mxu0
    %v958 = vadd.f32 %v290, %v957
    %v959 = vpop.f32.mrb[0].mxu0
    %960 = vmatprep.mubr.bf16.mxu0 0
    %961 = vmatmul.mubr.bf16.gmra.mrb[0].mxu0 %v435
    %v962 = vpop.f32.mrb[0].mxu0
    %v963 = vadd.f32 %v290, %v962
    %v964 = vpop.f32.mrb[0].mxu0
    %v965 = vpop.f32.mrb[0].mxu0
    %v966 = vadd.f32 %v290, %v965
    %v967 = vpop.f32.mrb[0].mxu0
    %968 = vmatprep.mubr.bf16.mxu0 0
    %969 = vmatmul.mubr.bf16.gmra.mrb[0].mxu0 %v438
    %v970 = vpop.f32.mrb[0].mxu0
    %v971 = vadd.f32 %v290, %v970
    %v972 = vpop.f32.mrb[0].mxu0
    %v973 = vpop.f32.mrb[0].mxu0
    %v974 = vadd.f32 %v290, %v973
    %v975 = vpop.f32.mrb[0].mxu0
    %976 = vmatprep.mubr.bf16.mxu0 0
    %977 = vmatmul.mubr.bf16.gmra.mrb[0].mxu0 %v441
    %v978 = vpop.f32.mrb[0].mxu0
    %v979 = vadd.f32 %v290, %v978
    %v980 = vpop.f32.mrb[0].mxu0
    %v981 = vpop.f32.mrb[0].mxu0
    %v982 = vadd.f32 %v290, %v981
    %v983 = vpop.f32.mrb[0].mxu0
    %984 = vmatprep.mubr.bf16.mxu0 0
    %985 = vmatmul.mubr.bf16.gmra.mrb[0].mxu0 %v444
    %v986 = vpop.f32.mrb[0].mxu0
    %v987 = vadd.f32 %v290, %v986
    %v988 = vpop.f32.mrb[0].mxu0
    %v989 = vpop.f32.mrb[0].mxu0
    %v990 = vadd.f32 %v290, %v989
    %v991 = vpop.f32.mrb[0].mxu0
    %992 = vmatprep.mubr.bf16.mxu0 0
    %993 = vmatmul.mubr.bf16.gmra.mrb[0].mxu0 %v447
    %v994 = vpop.f32.mrb[0].mxu0
    %v995 = vadd.f32 %v290, %v994
    %v996 = vpop.f32.mrb[0].mxu0
    %v997 = vpop.f32.mrb[0].mxu0
    %v998 = vadd.f32 %v290, %v997
    %v999 = vpop.f32.mrb[0].mxu0
    %1000 = vmatprep.mubr.bf16.mxu0 0
    %1001 = vmatmul.mubr.bf16.gmra.mrb[0].mxu0 %v450
    %v1002 = vpop.f32.mrb[0].mxu0
    %v1003 = vadd.f32 %v290, %v1002
    %v1004 = vpop.f32.mrb[0].mxu0
    %v1005 = vpop.f32.mrb[0].mxu0
    %v1006 = vadd.f32 %v290, %v1005
    %v1007 = vpop.f32.mrb[0].mxu0
    %1008 = vmatprep.mubr.bf16.mxu0 0
    %1009 = vmatmul.mubr.bf16.gmra.mrb[0].mxu0 %v453
    %v1010 = vpop.f32.mrb[0].mxu0
    %v1011 = vadd.f32 %v290, %v1010
    %v1012 = vpop.f32.mrb[0].mxu0
    %v1013 = vpop.f32.mrb[0].mxu0
    %v1014 = vadd.f32 %v290, %v1013
    %v1015 = vpop.f32.mrb[0].mxu0
    %1016 = vmatprep.mubr.bf16.mxu0 0
    %1017 = vmatmul.mubr.bf16.gmra.mrb[0].mxu0 %v456
    %v1018 = vpop.f32.mrb[0].mxu0
    %v1019 = vadd.f32 %v290, %v1018
    %v1020 = vpop.f32.mrb[0].mxu0
    %v1021 = vpop.f32.mrb[0].mxu0
    %v1022 = vadd.f32 %v290, %v1021
    %v1023 = vpop.f32.mrb[0].mxu0
    %1024 = vmatprep.mubr.bf16.mxu0 0
    %1025 = vmatmul.mubr.bf16.gmra.mrb[0].mxu0 %v459
    %v1026 = vpop.f32.mrb[0].mxu0
    %v1027 = vadd.f32 %v290, %v1026
    %v1028 = vpop.f32.mrb[0].mxu0
    %v1029 = vpop.f32.mrb[0].mxu0
    %v1030 = vadd.f32 %v290, %v1029
    %v1031 = vpop.f32.mrb[0].mxu0
    %1032 = vmatprep.mubr.bf16.mxu0 0
    %1033 = vmatmul.mubr.bf16.gmra.mrb[0].mxu0 %v462
    %v1034 = vpop.f32.mrb[0].mxu0
    %v1035 = vadd.f32 %v290, %v1034
    %v1036 = vpop.f32.mrb[0].mxu0
    %v1037 = vpop.f32.mrb[0].mxu0
    %v1038 = vadd.f32 %v290, %v1037
    %v1039 = vpop.f32.mrb[0].mxu0
    %1040 = vmatprep.mubr.bf16.mxu0 0
    %1041 = vmatmul.mubr.bf16.gmra.mrb[0].mxu0 %v465
    %v1042 = vpop.f32.mrb[0].mxu0
    %v1043 = vadd.f32 %v290, %v1042
    %v1044 = vpop.f32.mrb[0].mxu0
    %v1045 = vpop.f32.mrb[0].mxu0
    %v1046 = vadd.f32 %v290, %v1045
    %v1047 = vpop.f32.mrb[0].mxu0
    %1048 = vmatprep.mubr.bf16.mxu0 0
    %1049 = vmatmul.mubr.bf16.gmra.mrb[0].mxu0 %v468
    %v1050 = vpop.f32.mrb[0].mxu0
    %v1051 = vadd.f32 %v290, %v1050
    %v1052 = vpop.f32.mrb[0].mxu0
    %v1053 = vpop.f32.mrb[0].mxu0
    %v1054 = vadd.f32 %v290, %v1053
    %v1055 = vpop.f32.mrb[0].mxu0
    %1056 = vmatprep.mubr.bf16.mxu0 0
    %1057 = vmatmul.mubr.bf16.gmra.mrb[0].mxu0 %v471
    %v1058 = vpop.f32.mrb[0].mxu0
    %v1059 = vadd.f32 %v290, %v1058
    %v1060 = vpop.f32.mrb[0].mxu0
    %v1061 = vpop.f32.mrb[0].mxu0
    %v1062 = vadd.f32 %v290, %v1061
    %v1063 = vpop.f32.mrb[0].mxu0
    %1064 = vmatprep.mubr.bf16.mxu0 0
    %1065 = vmatmul.mubr.bf16.gmra.mrb[0].mxu0 %v474
    %v1066 = vpop.f32.mrb[0].mxu0
    %v1067 = vadd.f32 %v290, %v1066
    %v1068 = vpop.f32.mrb[0].mxu0
    %v1069 = vpop.f32.mrb[0].mxu0
    %v1070 = vadd.f32 %v290, %v1069
    %v1071 = vpop.f32.mrb[0].mxu0
    %1072 = vmatprep.mubr.bf16.mxu0 0
    %1073 = vmatmul.mubr.bf16.gmra.mrb[0].mxu0 %v477
    %v1074 = vpop.f32.mrb[0].mxu0
    %v1075 = vadd.f32 %v290, %v1074
    %v1076 = vpop.f32.mrb[0].mxu0
    %v1077 = vpop.f32.mrb[0].mxu0
    %v1078 = vadd.f32 %v290, %v1077
    %v1079 = vpop.f32.mrb[0].mxu0
    %1080 = vmatprep.mubr.bf16.mxu0 0
    %1081 = vmatmul.mubr.bf16.gmra.mrb[0].mxu0 %v480
    %v1082 = vpop.f32.mrb[0].mxu0
    %v1083 = vadd.f32 %v290, %v1082
    %v1084 = vpop.f32.mrb[0].mxu0
    %v1085 = vpop.f32.mrb[0].mxu0
    %v1086 = vadd.f32 %v290, %v1085
    %v1087 = vpop.f32.mrb[0].mxu0
    %1088 = vmatprep.mubr.bf16.mxu0 0
    %1089 = vmatmul.mubr.bf16.gmra.mrb[0].mxu0 %v483
    %v1090 = vpop.f32.mrb[0].mxu0
    %v1091 = vadd.f32 %v290, %v1090
    %v1092 = vpop.f32.mrb[0].mxu0
    %v1093 = vpop.f32.mrb[0].mxu0
    %v1094 = vadd.f32 %v290, %v1093
    %v1095 = vpop.f32.mrb[0].mxu0
    %1096 = vmatprep.mubr.bf16.mxu0 0
    %1097 = vmatmul.mubr.bf16.gmra.mrb[0].mxu0 %v486
    %v1098 = vpop.f32.mrb[0].mxu0
    %v1099 = vadd.f32 %v290, %v1098
    %v1100 = vpop.f32.mrb[0].mxu0
    %v1101 = vpop.f32.mrb[0].mxu0
    %v1102 = vadd.f32 %v290, %v1101
    %v1103 = vpop.f32.mrb[0].mxu0
    %1104 = vmatprep.mubr.bf16.mxu0 0
    %1105 = vmatmul.mubr.bf16.gmra.mrb[0].mxu0 %v489
    %v1106 = vpop.f32.mrb[0].mxu0
    %v1107 = vadd.f32 %v290, %v1106
    %v1108 = vpop.f32.mrb[0].mxu0
    %v1109 = vpop.f32.mrb[0].mxu0
    %v1110 = vadd.f32 %v290, %v1109
    %v1111 = vpop.f32.mrb[0].mxu0
    %1112 = vmatprep.mubr.bf16.mxu0 0
    %1113 = vmatmul.mubr.bf16.gmra.mrb[0].mxu0 %v492
    %v1114 = vpop.f32.mrb[0].mxu0
    %v1115 = vadd.f32 %v290, %v1114
    %v1116 = vpop.f32.mrb[0].mxu0
    %v1117 = vpop.f32.mrb[0].mxu0
    %v1118 = vadd.f32 %v290, %v1117
    %v1119 = vpop.f32.mrb[0].mxu0
    %1120 = vmatprep.mubr.bf16.mxu0 0
    %1121 = vmatmul.mubr.bf16.gmra.mrb[0].mxu0 %v495
    %v1122 = vpop.f32.mrb[0].mxu0
    %v1123 = vadd.f32 %v290, %v1122
    %v1124 = vpop.f32.mrb[0].mxu0
    %v1125 = vpop.f32.mrb[0].mxu0
    %v1126 = vadd.f32 %v290, %v1125
    %v1127 = vpop.f32.mrb[0].mxu0
    %1128 = vmatprep.mubr.bf16.mxu0 0
    %1129 = vmatmul.mubr.bf16.gmra.mrb[0].mxu0 %v498
    %v1130 = vpop.f32.mrb[0].mxu0
    %v1131 = vadd.f32 %v290, %v1130
    %v1132 = vpop.f32.mrb[0].mxu0
    %v1133 = vpop.f32.mrb[0].mxu0
    %v1134 = vadd.f32 %v290, %v1133
    %v1135 = vpop.f32.mrb[0].mxu0
    %1136 = vmatprep.mubr.bf16.mxu0 0
    %1137 = vmatmul.mubr.bf16.gmra.mrb[0].mxu0 %v501
    %v1138 = vpop.f32.mrb[0].mxu0
    %v1139 = vadd.f32 %v290, %v1138
    %v1140 = vpop.f32.mrb[0].mxu0
    %v1141 = vpop.f32.mrb[0].mxu0
    %v1142 = vadd.f32 %v290, %v1141
    %v1143 = vpop.f32.mrb[0].mxu0
    %1144 = vmatprep.mubr.bf16.mxu0 0
    %1145 = vmatmul.mubr.bf16.gmra.mrb[0].mxu0 %v504
    %v1146 = vpop.f32.mrb[0].mxu0
    %v1147 = vadd.f32 %v290, %v1146
    %v1148 = vpop.f32.mrb[0].mxu0
    %v1149 = vpop.f32.mrb[0].mxu0
    %v1150 = vadd.f32 %v290, %v1149
    %v1151 = vpop.f32.mrb[0].mxu0
    %1152 = vmatprep.mubr.bf16.mxu0 0
    %1153 = vmatmul.mubr.bf16.gmra.mrb[0].mxu0 %v507
    %v1154 = vpop.f32.mrb[0].mxu0
    %v1155 = vadd.f32 %v290, %v1154
    %v1156 = vpop.f32.mrb[0].mxu0
    %v1157 = vpop.f32.mrb[0].mxu0
    %v1158 = vadd.f32 %v290, %v1157
    %v1159 = vpop.f32.mrb[0].mxu0
    %1160 = vmatprep.mubr.bf16.mxu0 0
    %1161 = vmatmul.mubr.bf16.gmra.mrb[0].mxu0 %v510
    %v1162 = vpop.f32.mrb[0].mxu0
    %v1163 = vadd.f32 %v290, %v1162
    %v1164 = vpop.f32.mrb[0].mxu0
    %v1165 = vpop.f32.mrb[0].mxu0
    %v1166 = vadd.f32 %v290, %v1165
    %v1167 = vpop.f32.mrb[0].mxu0
    %1168 = vmatprep.mubr.bf16.mxu0 0
    %1169 = vmatmul.mubr.bf16.gmra.mrb[0].mxu0 %v513
    %v1170 = vpop.f32.mrb[0].mxu0
    %v1171 = vadd.f32 %v290, %v1170
    %v1172 = vpop.f32.mrb[0].mxu0
    %v1173 = vpop.f32.mrb[0].mxu0
    %v1174 = vadd.f32 %v290, %v1173
    %v1175 = vpop.f32.mrb[0].mxu0
    %1176 = vmatprep.mubr.bf16.mxu0 0
    %1177 = vmatmul.mubr.bf16.gmra.mrb[0].mxu0 %v516
    %v1178 = vpop.f32.mrb[0].mxu0
    %v1179 = vadd.f32 %v290, %v1178
    %v1180 = vpop.f32.mrb[0].mxu0
    %v1181 = vpop.f32.mrb[0].mxu0
    %v1182 = vadd.f32 %v290, %v1181
    %v1183 = vpop.f32.mrb[0].mxu0
    %1184 = vmatprep.mubr.bf16.mxu0 0
    %1185 = vmatmul.mubr.bf16.gmra.mrb[0].mxu0 %v519
    %v1186 = vpop.f32.mrb[0].mxu0
    %v1187 = vadd.f32 %v290, %v1186
    %v1188 = vpop.f32.mrb[0].mxu0
    %v1189 = vpop.f32.mrb[0].mxu0
    %v1190 = vadd.f32 %v290, %v1189
    %v1191 = vpop.f32.mrb[0].mxu0
    %1192 = vmatprep.mubr.bf16.mxu0 0
    %1193 = vmatmul.mubr.bf16.gmra.mrb[0].mxu0 %v522
    %v1194 = vpop.f32.mrb[0].mxu0
    %v1195 = vadd.f32 %v290, %v1194
    %v1196 = vpop.f32.mrb[0].mxu0
    %v1197 = vpop.f32.mrb[0].mxu0
    %v1198 = vadd.f32 %v290, %v1197
    %v1199 = vpop.f32.mrb[0].mxu0
    %1200 = vmatprep.mubr.bf16.mxu0 0
    %1201 = vmatmul.mubr.bf16.gmra.mrb[0].mxu0 %v525
    %v1202 = vpop.f32.mrb[0].mxu0
    %v1203 = vadd.f32 %v290, %v1202
    %v1204 = vpop.f32.mrb[0].mxu0
    %v1205 = vpop.f32.mrb[0].mxu0
    %v1206 = vadd.f32 %v290, %v1205
    %v1207 = vpop.f32.mrb[0].mxu0
    %1208 = vmatprep.mubr.bf16.mxu0 0
    %1209 = vmatmul.mubr.bf16.gmra.mrb[0].mxu0 %v528
    %v1210 = vpop.f32.mrb[0].mxu0
    %v1211 = vadd.f32 %v290, %v1210
    %v1212 = vpop.f32.mrb[0].mxu0
    %v1213 = vpop.f32.mrb[0].mxu0
    %v1214 = vadd.f32 %v290, %v1213
    %v1215 = vpop.f32.mrb[0].mxu0
    %1216 = vmatprep.mubr.bf16.mxu0 0
    %1217 = vmatmul.mubr.bf16.gmra.mrb[0].mxu0 %v531
    %v1218 = vpop.f32.mrb[0].mxu0
    %v1219 = vadd.f32 %v290, %v1218
    %v1220 = vpop.f32.mrb[0].mxu0
    %v1221 = vpop.f32.mrb[0].mxu0
    %v1222 = vadd.f32 %v290, %v1221
    %v1223 = vpop.f32.mrb[0].mxu0
    %1224 = vmatprep.mubr.bf16.mxu0 0
    %1225 = vmatmul.mubr.bf16.gmra.mrb[0].mxu0 %v534
    %v1226 = vpop.f32.mrb[0].mxu0
    %v1227 = vadd.f32 %v290, %v1226
    %v1228 = vpop.f32.mrb[0].mxu0
    %v1229 = vpop.f32.mrb[0].mxu0
    %v1230 = vadd.f32 %v290, %v1229
    %v1231 = vpop.f32.mrb[0].mxu0
    %1232 = vmatprep.mubr.bf16.mxu0 0
    %1233 = vmatmul.mubr.bf16.gmra.mrb[0].mxu0 %v537
    %v1234 = vpop.f32.mrb[0].mxu0
    %v1235 = vadd.f32 %v290, %v1234
    %v1236 = vpop.f32.mrb[0].mxu0
    %v1237 = vpop.f32.mrb[0].mxu0
    %v1238 = vadd.f32 %v290, %v1237
    %v1239 = vpop.f32.mrb[0].mxu0
    %1240 = vmatprep.mubr.bf16.mxu0 0
    %1241 = vmatmul.mubr.bf16.gmra.mrb[0].mxu0 %v540
    %v1242 = vpop.f32.mrb[0].mxu0
    %v1243 = vadd.f32 %v290, %v1242
    %v1244 = vpop.f32.mrb[0].mxu0
    %v1245 = vpop.f32.mrb[0].mxu0
    %v1246 = vadd.f32 %v290, %v1245
    %v1247 = vpop.f32.mrb[0].mxu0
    %1248 = vmatprep.mubr.bf16.mxu0 0
    %1249 = vmatmul.mubr.bf16.gmra.mrb[0].mxu0 %v543
    %v1250 = vpop.f32.mrb[0].mxu0
    %v1251 = vadd.f32 %v290, %v1250
    %v1252 = vpop.f32.mrb[0].mxu0
    %v1253 = vpop.f32.mrb[0].mxu0
    %v1254 = vadd.f32 %v290, %v1253
    %v1255 = vpop.f32.mrb[0].mxu0
    %1256 = vmatprep.mubr.bf16.mxu0 0
    %1257 = vmatmul.mubr.bf16.gmra.mrb[0].mxu0 %v546
    %v1258 = vpop.f32.mrb[0].mxu0
    %v1259 = vadd.f32 %v290, %v1258
    %v1260 = vpop.f32.mrb[0].mxu0
    %v1261 = vpop.f32.mrb[0].mxu0
    %v1262 = vadd.f32 %v290, %v1261
    %v1263 = vpop.f32.mrb[0].mxu0
    %1264 = vmatprep.mubr.bf16.mxu0 0
    %1265 = vmatmul.mubr.bf16.gmra.mrb[0].mxu0 %v549
    %v1266 = vpop.f32.mrb[0].mxu0
    %v1267 = vadd.f32 %v290, %v1266
    %v1268 = vpop.f32.mrb[0].mxu0
    %v1269 = vpop.f32.mrb[0].mxu0
    %v1270 = vadd.f32 %v290, %v1269
    %v1271 = vpop.f32.mrb[0].mxu0
    %1272 = vmatprep.mubr.bf16.mxu0 0
    %1273 = vmatmul.mubr.bf16.gmra.mrb[0].mxu0 %v552
    %v1274 = vpop.f32.mrb[0].mxu0
    %v1275 = vadd.f32 %v290, %v1274
    %v1276 = vpop.f32.mrb[0].mxu0
    %v1277 = vpop.f32.mrb[0].mxu0
    %v1278 = vadd.f32 %v290, %v1277
    %v1279 = vpop.f32.mrb[0].mxu0
    %1280 = vmatprep.mubr.bf16.mxu0 0
    %1281 = vmatmul.mubr.bf16.gmra.mrb[0].mxu0 %v555
    %v1282 = vpop.f32.mrb[0].mxu0
    %v1283 = vadd.f32 %v290, %v1282
    %v1284 = vpop.f32.mrb[0].mxu0
    %v1285 = vpop.f32.mrb[0].mxu0
    %v1286 = vadd.f32 %v290, %v1285
    %v1287 = vpop.f32.mrb[0].mxu0
    %1288 = vmatprep.mubr.bf16.mxu0 0
    %1289 = vmatmul.mubr.bf16.gmra.mrb[0].mxu0 %v558
    %v1290 = vpop.f32.mrb[0].mxu0
    %v1291 = vadd.f32 %v290, %v1290
    %v1292 = vpop.f32.mrb[0].mxu0
    %v1293 = vpop.f32.mrb[0].mxu0
    %v1294 = vadd.f32 %v290, %v1293
    %v1295 = vpop.f32.mrb[0].mxu0
    %1296 = vmatprep.mubr.bf16.mxu0 0
    %1297 = vmatmul.mubr.bf16.gmra.mrb[0].mxu0 %v561
    %v1298 = vpop.f32.mrb[0].mxu0
    %v1299 = vadd.f32 %v290, %v1298
    %v1300 = vpop.f32.mrb[0].mxu0
    %v1301 = vpop.f32.mrb[0].mxu0
    %v1302 = vadd.f32 %v290, %v1301
    %v1303 = vpop.f32.mrb[0].mxu0
    %1304 = vmatprep.mubr.bf16.mxu0 0
    %1305 = vmatmul.mubr.bf16.gmra.mrb[0].mxu0 %v564
    %v1306 = vpop.f32.mrb[0].mxu0
    %v1307 = vadd.f32 %v290, %v1306
    %v1308 = vpop.f32.mrb[0].mxu0
    %v1309 = vpop.f32.mrb[0].mxu0
    %v1310 = vadd.f32 %v290, %v1309
    %v1311 = vpop.f32.mrb[0].mxu0
    %1312 = vmatprep.mubr.bf16.mxu0 0
    %1313 = vmatmul.mubr.bf16.gmra.mrb[0].mxu0 %v567
    %v1314 = vpop.f32.mrb[0].mxu0
    %v1315 = vadd.f32 %v290, %v1314
    %v1316 = vpop.f32.mrb[0].mxu0
    %v1317 = vpop.f32.mrb[0].mxu0
    %v1318 = vpop.f32.mrb[0].mxu0
    %1319 = vdwg.mxu0
    %v1320 = vpack.c.bf16 %v614, %v611
    %v1321 = vpack.c.bf16 %v622, %v619
    %v1322 = vpack.c.bf16 %v630, %v627
    %v1323 = vpack.c.bf16 %v638, %v635
    %v1324 = vpack.c.bf16 %v646, %v643
    %v1325 = vpack.c.bf16 %v654, %v651
    %v1326 = vpack.c.bf16 %v662, %v659
    %v1327 = vpack.c.bf16 %v670, %v667
    %v1328 = vpack.c.bf16 %v678, %v675
    %v1329 = vpack.c.bf16 %v686, %v683
    %v1330 = vpack.c.bf16 %v694, %v691
    %v1331 = vpack.c.bf16 %v702, %v699
    %v1332 = vpack.c.bf16 %v710, %v707
    %v1333 = vpack.c.bf16 %v718, %v715
    %v1334 = vpack.c.bf16 %v726, %v723
    %v1335 = vpack.c.bf16 %v734, %v731
    %v1336 = vpack.c.bf16 %v742, %v739
    %v1337 = vpack.c.bf16 %v750, %v747
    %v1338 = vpack.c.bf16 %v758, %v755
    %v1339 = vpack.c.bf16 %v766, %v763
    %v1340 = vpack.c.bf16 %v774, %v771
    %v1341 = vpack.c.bf16 %v782, %v779
    %v1342 = vpack.c.bf16 %v790, %v787
    %v1343 = vpack.c.bf16 %v798, %v795
    %v1344 = vpack.c.bf16 %v806, %v803
    %v1345 = vpack.c.bf16 %v814, %v811
    %v1346 = vpack.c.bf16 %v822, %v819
    %v1347 = vpack.c.bf16 %v830, %v827
    %v1348 = vpack.c.bf16 %v838, %v835
    %v1349 = vpack.c.bf16 %v846, %v843
    %v1350 = vpack.c.bf16 %v854, %v851
    %v1351 = vpack.c.bf16 %v862, %v859
    %v1352 = vpack.c.bf16 %v870, %v867
    %v1353 = vpack.c.bf16 %v878, %v875
    %v1354 = vpack.c.bf16 %v886, %v883
    %v1355 = vpack.c.bf16 %v894, %v891
    %v1356 = vpack.c.bf16 %v902, %v899
    %v1357 = vpack.c.bf16 %v910, %v907
    %v1358 = vpack.c.bf16 %v918, %v915
    %v1359 = vpack.c.bf16 %v926, %v923
    %v1360 = vpack.c.bf16 %v934, %v931
    %v1361 = vpack.c.bf16 %v942, %v939
    %v1362 = vpack.c.bf16 %v950, %v947
    %v1363 = vpack.c.bf16 %v958, %v955
    %v1364 = vpack.c.bf16 %v966, %v963
    %v1365 = vpack.c.bf16 %v974, %v971
    %v1366 = vpack.c.bf16 %v982, %v979
    %v1367 = vpack.c.bf16 %v990, %v987
    %v1368 = vpack.c.bf16 %v998, %v995
    %v1369 = vpack.c.bf16 %v1006, %v1003
    %v1370 = vpack.c.bf16 %v1014, %v1011
    %v1371 = vpack.c.bf16 %v1022, %v1019
    %v1372 = vpack.c.bf16 %v1030, %v1027
    %v1373 = vpack.c.bf16 %v1038, %v1035
    %v1374 = vpack.c.bf16 %v1046, %v1043
    %v1375 = vpack.c.bf16 %v1054, %v1051
    %v1376 = vpack.c.bf16 %v1062, %v1059
    %v1377 = vpack.c.bf16 %v1070, %v1067
    %v1378 = vpack.c.bf16 %v1078, %v1075
    %v1379 = vpack.c.bf16 %v1086, %v1083
    %v1380 = vpack.c.bf16 %v1094, %v1091
    %v1381 = vpack.c.bf16 %v1102, %v1099
    %v1382 = vpack.c.bf16 %v1110, %v1107
    %v1383 = vpack.c.bf16 %v1118, %v1115
    %v1384 = vpack.c.bf16 %v1126, %v1123
    %v1385 = vpack.c.bf16 %v1134, %v1131
    %v1386 = vpack.c.bf16 %v1142, %v1139
    %v1387 = vpack.c.bf16 %v1150, %v1147
    %v1388 = vpack.c.bf16 %v1158, %v1155
    %v1389 = vpack.c.bf16 %v1166, %v1163
    %v1390 = vpack.c.bf16 %v1174, %v1171
    %v1391 = vpack.c.bf16 %v1182, %v1179
    %v1392 = vpack.c.bf16 %v1190, %v1187
    %v1393 = vpack.c.bf16 %v1198, %v1195
    %v1394 = vpack.c.bf16 %v1206, %v1203
    %v1395 = vpack.c.bf16 %v1214, %v1211
    %v1396 = vpack.c.bf16 %v1222, %v1219
    %v1397 = vpack.c.bf16 %v1230, %v1227
    %v1398 = vpack.c.bf16 %v1238, %v1235
    %v1399 = vpack.c.bf16 %v1246, %v1243
    %v1400 = vpack.c.bf16 %v1254, %v1251
    %v1401 = vpack.c.bf16 %v1262, %v1259
    %v1402 = vpack.c.bf16 %v1270, %v1267
    %v1403 = vpack.c.bf16 %v1278, %v1275
    %v1404 = vpack.c.bf16 %v1286, %v1283
    %v1405 = vpack.c.bf16 %v1294, %v1291
    %v1406 = vpack.c.bf16 %v1302, %v1299
    %v1407 = vpack.c.bf16 %v1310, %v1307
    %v1408 = vpack.c.bf16 %v1315, %v1315
    %v1498 = vunpack.c.l.b16 %v1320
    %v1499 = vunpack.c.h.b16 %v1320
    %v1500 = vunpack.c.l.b16 %v1321
    %v1501 = vunpack.c.h.b16 %v1321
    %v1502 = vunpack.c.l.b16 %v1322
    %v1503 = vunpack.c.h.b16 %v1322
    %v1504 = vunpack.c.l.b16 %v1323
    %v1505 = vunpack.c.h.b16 %v1323
    %v1506 = vunpack.c.l.b16 %v1324
    %v1507 = vunpack.c.h.b16 %v1324
    %v1508 = vunpack.c.l.b16 %v1325
    %v1509 = vunpack.c.h.b16 %v1325
    %v1510 = vunpack.c.l.b16 %v1326
    %v1511 = vunpack.c.h.b16 %v1326
    %v1512 = vunpack.c.l.b16 %v1327
    %v1513 = vunpack.c.h.b16 %v1327
    %v1514 = vunpack.c.l.b16 %v1328
    %v1515 = vunpack.c.h.b16 %v1328
    %v1516 = vunpack.c.l.b16 %v1329
    %v1517 = vunpack.c.h.b16 %v1329
    %v1518 = vunpack.c.l.b16 %v1330
    %v1519 = vunpack.c.h.b16 %v1330
    %v1520 = vunpack.c.l.b16 %v1331
    %v1521 = vunpack.c.h.b16 %v1331
    %v1522 = vunpack.c.l.b16 %v1332
    %v1523 = vunpack.c.h.b16 %v1332
    %v1524 = vunpack.c.l.b16 %v1333
    %v1525 = vunpack.c.h.b16 %v1333
    %v1526 = vunpack.c.l.b16 %v1334
    %v1527 = vunpack.c.h.b16 %v1334
    %v1528 = vunpack.c.l.b16 %v1335
    %v1529 = vunpack.c.h.b16 %v1335
    %v1530 = vunpack.c.l.b16 %v1336
    %v1531 = vunpack.c.h.b16 %v1336
    %v1532 = vunpack.c.l.b16 %v1337
    %v1533 = vunpack.c.h.b16 %v1337
    %v1534 = vunpack.c.l.b16 %v1338
    %v1535 = vunpack.c.h.b16 %v1338
    %v1536 = vunpack.c.l.b16 %v1339
    %v1537 = vunpack.c.h.b16 %v1339
    %v1538 = vunpack.c.l.b16 %v1340
    %v1539 = vunpack.c.h.b16 %v1340
    %v1540 = vunpack.c.l.b16 %v1341
    %v1541 = vunpack.c.h.b16 %v1341
    %v1542 = vunpack.c.l.b16 %v1342
    %v1543 = vunpack.c.h.b16 %v1342
    %v1544 = vunpack.c.l.b16 %v1343
    %v1545 = vunpack.c.h.b16 %v1343
    %v1546 = vunpack.c.l.b16 %v1344
    %v1547 = vunpack.c.h.b16 %v1344
    %v1548 = vunpack.c.l.b16 %v1345
    %v1549 = vunpack.c.h.b16 %v1345
    %v1550 = vunpack.c.l.b16 %v1346
    %v1551 = vunpack.c.h.b16 %v1346
    %v1552 = vunpack.c.l.b16 %v1347
    %v1553 = vunpack.c.h.b16 %v1347
    %v1554 = vunpack.c.l.b16 %v1348
    %v1555 = vunpack.c.h.b16 %v1348
    %v1556 = vunpack.c.l.b16 %v1349
    %v1557 = vunpack.c.h.b16 %v1349
    %v1558 = vunpack.c.l.b16 %v1350
    %v1559 = vunpack.c.h.b16 %v1350
    %v1560 = vunpack.c.l.b16 %v1351
    %v1561 = vunpack.c.h.b16 %v1351
    %v1562 = vunpack.c.l.b16 %v1352
    %v1563 = vunpack.c.h.b16 %v1352
    %v1564 = vunpack.c.l.b16 %v1353
    %v1565 = vunpack.c.h.b16 %v1353
    %v1566 = vunpack.c.l.b16 %v1354
    %v1567 = vunpack.c.h.b16 %v1354
    %v1568 = vunpack.c.l.b16 %v1355
    %v1569 = vunpack.c.h.b16 %v1355
    %v1570 = vunpack.c.l.b16 %v1356
    %v1571 = vunpack.c.h.b16 %v1356
    %v1572 = vunpack.c.l.b16 %v1357
    %v1573 = vunpack.c.h.b16 %v1357
    %v1574 = vunpack.c.l.b16 %v1358
    %v1575 = vunpack.c.h.b16 %v1358
    %v1576 = vunpack.c.l.b16 %v1359
    %v1577 = vunpack.c.h.b16 %v1359
    %v1578 = vunpack.c.l.b16 %v1360
    %v1579 = vunpack.c.h.b16 %v1360
    %v1580 = vunpack.c.l.b16 %v1361
    %v1581 = vunpack.c.h.b16 %v1361
    %v1582 = vunpack.c.l.b16 %v1362
    %v1583 = vunpack.c.h.b16 %v1362
    %v1584 = vunpack.c.l.b16 %v1363
    %v1585 = vunpack.c.h.b16 %v1363
    %v1586 = vunpack.c.l.b16 %v1364
    %v1587 = vunpack.c.h.b16 %v1364
    %v1588 = vunpack.c.l.b16 %v1365
    %v1589 = vunpack.c.h.b16 %v1365
    %v1590 = vunpack.c.l.b16 %v1366
    %v1591 = vunpack.c.h.b16 %v1366
    %v1592 = vunpack.c.l.b16 %v1367
    %v1593 = vunpack.c.h.b16 %v1367
    %v1594 = vunpack.c.l.b16 %v1368
    %v1595 = vunpack.c.h.b16 %v1368
    %v1596 = vunpack.c.l.b16 %v1369
    %v1597 = vunpack.c.h.b16 %v1369
    %v1598 = vunpack.c.l.b16 %v1370
    %v1599 = vunpack.c.h.b16 %v1370
    %v1600 = vunpack.c.l.b16 %v1371
    %v1601 = vunpack.c.h.b16 %v1371
    %v1602 = vunpack.c.l.b16 %v1372
    %v1603 = vunpack.c.h.b16 %v1372
    %v1604 = vunpack.c.l.b16 %v1373
    %v1605 = vunpack.c.h.b16 %v1373
    %v1606 = vunpack.c.l.b16 %v1374
    %v1607 = vunpack.c.h.b16 %v1374
    %v1608 = vunpack.c.l.b16 %v1375
    %v1609 = vunpack.c.h.b16 %v1375
    %v1610 = vunpack.c.l.b16 %v1376
    %v1611 = vunpack.c.h.b16 %v1376
    %v1612 = vunpack.c.l.b16 %v1377
    %v1613 = vunpack.c.h.b16 %v1377
    %v1614 = vunpack.c.l.b16 %v1378
    %v1615 = vunpack.c.h.b16 %v1378
    %v1616 = vunpack.c.l.b16 %v1379
    %v1617 = vunpack.c.h.b16 %v1379
    %v1618 = vunpack.c.l.b16 %v1380
    %v1619 = vunpack.c.h.b16 %v1380
    %v1620 = vunpack.c.l.b16 %v1381
    %v1621 = vunpack.c.h.b16 %v1381
    %v1622 = vunpack.c.l.b16 %v1382
    %v1623 = vunpack.c.h.b16 %v1382
    %v1624 = vunpack.c.l.b16 %v1383
    %v1625 = vunpack.c.h.b16 %v1383
    %v1626 = vunpack.c.l.b16 %v1384
    %v1627 = vunpack.c.h.b16 %v1384
    %v1628 = vunpack.c.l.b16 %v1385
    %v1629 = vunpack.c.h.b16 %v1385
    %v1630 = vunpack.c.l.b16 %v1386
    %v1631 = vunpack.c.h.b16 %v1386
    %v1632 = vunpack.c.l.b16 %v1387
    %v1633 = vunpack.c.h.b16 %v1387
    %v1634 = vunpack.c.l.b16 %v1388
    %v1635 = vunpack.c.h.b16 %v1388
    %v1636 = vunpack.c.l.b16 %v1389
    %v1637 = vunpack.c.h.b16 %v1389
    %v1638 = vunpack.c.l.b16 %v1390
    %v1639 = vunpack.c.h.b16 %v1390
    %v1640 = vunpack.c.l.b16 %v1391
    %v1641 = vunpack.c.h.b16 %v1391
    %v1642 = vunpack.c.l.b16 %v1392
    %v1643 = vunpack.c.h.b16 %v1392
    %v1644 = vunpack.c.l.b16 %v1393
    %v1645 = vunpack.c.h.b16 %v1393
    %v1646 = vunpack.c.l.b16 %v1394
    %v1647 = vunpack.c.h.b16 %v1394
    %v1648 = vunpack.c.l.b16 %v1395
    %v1649 = vunpack.c.h.b16 %v1395
    %v1650 = vunpack.c.l.b16 %v1396
    %v1651 = vunpack.c.h.b16 %v1396
    %v1652 = vunpack.c.l.b16 %v1397
    %v1653 = vunpack.c.h.b16 %v1397
    %v1654 = vunpack.c.l.b16 %v1398
    %v1655 = vunpack.c.h.b16 %v1398
    %v1656 = vunpack.c.l.b16 %v1399
    %v1657 = vunpack.c.h.b16 %v1399
    %v1658 = vunpack.c.l.b16 %v1400
    %v1659 = vunpack.c.h.b16 %v1400
    %v1660 = vunpack.c.l.b16 %v1401
    %v1661 = vunpack.c.h.b16 %v1401
    %v1662 = vunpack.c.l.b16 %v1402
    %v1663 = vunpack.c.h.b16 %v1402
    %v1664 = vunpack.c.l.b16 %v1403
    %v1665 = vunpack.c.h.b16 %v1403
    %v1666 = vunpack.c.l.b16 %v1404
    %v1667 = vunpack.c.h.b16 %v1404
    %v1668 = vunpack.c.l.b16 %v1405
    %v1669 = vunpack.c.h.b16 %v1405
    %v1670 = vunpack.c.l.b16 %v1406
    %v1671 = vunpack.c.h.b16 %v1406
    %v1672 = vunpack.c.l.b16 %v1407
    %v1673 = vunpack.c.h.b16 %v1407
    %v1674 = vunpack.c.l.b16 %v1408
    %v1675 = vpack.c.b16 %v1498, %v1498
    %v1676 = vpack.c.b16 %v1499, %v1499
    %v1677 = vpack.c.b16 %v1500, %v1500
    %v1678 = vpack.c.b16 %v1501, %v1501
    %v1679 = vpack.c.b16 %v1502, %v1502
    %v1680 = vpack.c.b16 %v1503, %v1503
    %v1681 = vpack.c.b16 %v1504, %v1504
    %v1682 = vpack.c.b16 %v1505, %v1505
    %v1683 = vpack.c.b16 %v1506, %v1506
    %v1684 = vpack.c.b16 %v1507, %v1507
    %v1685 = vpack.c.b16 %v1508, %v1508
    %v1686 = vpack.c.b16 %v1509, %v1509
    %v1687 = vpack.c.b16 %v1510, %v1510
    %v1688 = vpack.c.b16 %v1511, %v1511
    %v1689 = vpack.c.b16 %v1512, %v1512
    %v1690 = vpack.c.b16 %v1513, %v1513
    %v1691 = vpack.c.b16 %v1514, %v1514
    %v1692 = vpack.c.b16 %v1515, %v1515
    %v1693 = vpack.c.b16 %v1516, %v1516
    %v1694 = vpack.c.b16 %v1517, %v1517
    %v1695 = vpack.c.b16 %v1518, %v1518
    %v1696 = vpack.c.b16 %v1519, %v1519
    %v1697 = vpack.c.b16 %v1520, %v1520
    %v1698 = vpack.c.b16 %v1521, %v1521
    %v1699 = vpack.c.b16 %v1522, %v1522
    %v1700 = vpack.c.b16 %v1523, %v1523
    %v1701 = vpack.c.b16 %v1524, %v1524
    %v1702 = vpack.c.b16 %v1525, %v1525
    %v1703 = vpack.c.b16 %v1526, %v1526
    %v1704 = vpack.c.b16 %v1527, %v1527
    %v1705 = vpack.c.b16 %v1528, %v1528
    %v1706 = vpack.c.b16 %v1529, %v1529
    %v1707 = vpack.c.b16 %v1530, %v1530
    %v1708 = vpack.c.b16 %v1531, %v1531
    %v1709 = vpack.c.b16 %v1532, %v1532
    %v1710 = vpack.c.b16 %v1533, %v1533
    %v1711 = vpack.c.b16 %v1534, %v1534
    %v1712 = vpack.c.b16 %v1535, %v1535
    %v1713 = vpack.c.b16 %v1536, %v1536
    %v1714 = vpack.c.b16 %v1537, %v1537
    %v1715 = vpack.c.b16 %v1538, %v1538
    %v1716 = vpack.c.b16 %v1539, %v1539
    %v1717 = vpack.c.b16 %v1540, %v1540
    %v1718 = vpack.c.b16 %v1541, %v1541
    %v1719 = vpack.c.b16 %v1542, %v1542
    %v1720 = vpack.c.b16 %v1543, %v1543
    %v1721 = vpack.c.b16 %v1544, %v1544
    %v1722 = vpack.c.b16 %v1545, %v1545
    %v1723 = vpack.c.b16 %v1546, %v1546
    %v1724 = vpack.c.b16 %v1547, %v1547
    %v1725 = vpack.c.b16 %v1548, %v1548
    %v1726 = vpack.c.b16 %v1549, %v1549
    %v1727 = vpack.c.b16 %v1550, %v1550
    %v1728 = vpack.c.b16 %v1551, %v1551
    %v1729 = vpack.c.b16 %v1552, %v1552
    %v1730 = vpack.c.b16 %v1553, %v1553
    %v1731 = vpack.c.b16 %v1554, %v1554
    %v1732 = vpack.c.b16 %v1555, %v1555
    %v1733 = vpack.c.b16 %v1556, %v1556
    %v1734 = vpack.c.b16 %v1557, %v1557
    %v1735 = vpack.c.b16 %v1558, %v1558
    %v1736 = vpack.c.b16 %v1559, %v1559
    %v1737 = vpack.c.b16 %v1560, %v1560
    %v1738 = vpack.c.b16 %v1561, %v1561
    %v1739 = vpack.c.b16 %v1562, %v1562
    %v1740 = vpack.c.b16 %v1563, %v1563
    %v1741 = vpack.c.b16 %v1564, %v1564
    %v1742 = vpack.c.b16 %v1565, %v1565
    %v1743 = vpack.c.b16 %v1566, %v1566
    %v1744 = vpack.c.b16 %v1567, %v1567
    %v1745 = vpack.c.b16 %v1568, %v1568
    %v1746 = vpack.c.b16 %v1569, %v1569
    %v1747 = vpack.c.b16 %v1570, %v1570
    %v1748 = vpack.c.b16 %v1571, %v1571
    %v1749 = vpack.c.b16 %v1572, %v1572
    %v1750 = vpack.c.b16 %v1573, %v1573
    %v1751 = vpack.c.b16 %v1574, %v1574
    %v1752 = vpack.c.b16 %v1575, %v1575
    %v1753 = vpack.c.b16 %v1576, %v1576
    %v1754 = vpack.c.b16 %v1577, %v1577
    %v1755 = vpack.c.b16 %v1578, %v1578
    %v1756 = vpack.c.b16 %v1579, %v1579
    %v1757 = vpack.c.b16 %v1580, %v1580
    %v1758 = vpack.c.b16 %v1581, %v1581
    %v1759 = vpack.c.b16 %v1582, %v1582
    %v1760 = vpack.c.b16 %v1583, %v1583
    %v1761 = vpack.c.b16 %v1584, %v1584
    %v1762 = vpack.c.b16 %v1585, %v1585
    %v1763 = vpack.c.b16 %v1586, %v1586
    %v1764 = vpack.c.b16 %v1587, %v1587
    %v1765 = vpack.c.b16 %v1588, %v1588
    %v1766 = vpack.c.b16 %v1589, %v1589
    %v1767 = vpack.c.b16 %v1590, %v1590
    %v1768 = vpack.c.b16 %v1591, %v1591
    %v1769 = vpack.c.b16 %v1592, %v1592
    %v1770 = vpack.c.b16 %v1593, %v1593
    %v1771 = vpack.c.b16 %v1594, %v1594
    %v1772 = vpack.c.b16 %v1595, %v1595
    %v1773 = vpack.c.b16 %v1596, %v1596
    %v1774 = vpack.c.b16 %v1597, %v1597
    %v1775 = vpack.c.b16 %v1598, %v1598
    %v1776 = vpack.c.b16 %v1599, %v1599
    %v1777 = vpack.c.b16 %v1600, %v1600
    %v1778 = vpack.c.b16 %v1601, %v1601
    %v1779 = vpack.c.b16 %v1602, %v1602
    %v1780 = vpack.c.b16 %v1603, %v1603
    %v1781 = vpack.c.b16 %v1604, %v1604
    %v1782 = vpack.c.b16 %v1605, %v1605
    %v1783 = vpack.c.b16 %v1606, %v1606
    %v1784 = vpack.c.b16 %v1607, %v1607
    %v1785 = vpack.c.b16 %v1608, %v1608
    %v1786 = vpack.c.b16 %v1609, %v1609
    %v1787 = vpack.c.b16 %v1610, %v1610
    %v1788 = vpack.c.b16 %v1611, %v1611
    %v1789 = vpack.c.b16 %v1612, %v1612
    %v1790 = vpack.c.b16 %v1613, %v1613
    %v1791 = vpack.c.b16 %v1614, %v1614
    %v1792 = vpack.c.b16 %v1615, %v1615
    %v1793 = vpack.c.b16 %v1616, %v1616
    %v1794 = vpack.c.b16 %v1617, %v1617
    %v1795 = vpack.c.b16 %v1618, %v1618
    %v1796 = vpack.c.b16 %v1619, %v1619
    %v1797 = vpack.c.b16 %v1620, %v1620
    %v1798 = vpack.c.b16 %v1621, %v1621
    %v1799 = vpack.c.b16 %v1622, %v1622
    %v1800 = vpack.c.b16 %v1623, %v1623
    %v1801 = vpack.c.b16 %v1624, %v1624
    %v1802 = vpack.c.b16 %v1625, %v1625
    %v1803 = vpack.c.b16 %v1626, %v1626
    %v1804 = vpack.c.b16 %v1627, %v1627
    %v1805 = vpack.c.b16 %v1628, %v1628
    %v1806 = vpack.c.b16 %v1629, %v1629
    %v1807 = vpack.c.b16 %v1630, %v1630
    %v1808 = vpack.c.b16 %v1631, %v1631
    %v1809 = vpack.c.b16 %v1632, %v1632
    %v1810 = vpack.c.b16 %v1633, %v1633
    %v1811 = vpack.c.b16 %v1634, %v1634
    %v1812 = vpack.c.b16 %v1635, %v1635
    %v1813 = vpack.c.b16 %v1636, %v1636
    %v1814 = vpack.c.b16 %v1637, %v1637
    %v1815 = vpack.c.b16 %v1638, %v1638
    %v1816 = vpack.c.b16 %v1639, %v1639
    %v1817 = vpack.c.b16 %v1640, %v1640
    %v1818 = vpack.c.b16 %v1641, %v1641
    %v1819 = vpack.c.b16 %v1642, %v1642
    %v1820 = vpack.c.b16 %v1643, %v1643
    %v1821 = vpack.c.b16 %v1644, %v1644
    %v1822 = vpack.c.b16 %v1645, %v1645
    %v1823 = vpack.c.b16 %v1646, %v1646
    %v1824 = vpack.c.b16 %v1647, %v1647
    %v1825 = vpack.c.b16 %v1648, %v1648
    %v1826 = vpack.c.b16 %v1649, %v1649
    %v1827 = vpack.c.b16 %v1650, %v1650
    %v1828 = vpack.c.b16 %v1651, %v1651
    %v1829 = vpack.c.b16 %v1652, %v1652
    %v1830 = vpack.c.b16 %v1653, %v1653
    %v1831 = vpack.c.b16 %v1654, %v1654
    %v1832 = vpack.c.b16 %v1655, %v1655
    %v1833 = vpack.c.b16 %v1656, %v1656
    %v1834 = vpack.c.b16 %v1657, %v1657
    %v1835 = vpack.c.b16 %v1658, %v1658
    %v1836 = vpack.c.b16 %v1659, %v1659
    %v1837 = vpack.c.b16 %v1660, %v1660
    %v1838 = vpack.c.b16 %v1661, %v1661
    %v1839 = vpack.c.b16 %v1662, %v1662
    %v1840 = vpack.c.b16 %v1663, %v1663
    %v1841 = vpack.c.b16 %v1664, %v1664
    %v1842 = vpack.c.b16 %v1665, %v1665
    %v1843 = vpack.c.b16 %v1666, %v1666
    %v1844 = vpack.c.b16 %v1667, %v1667
    %v1845 = vpack.c.b16 %v1668, %v1668
    %v1846 = vpack.c.b16 %v1669, %v1669
    %v1847 = vpack.c.b16 %v1670, %v1670
    %v1848 = vpack.c.b16 %v1671, %v1671
    %v1849 = vpack.c.b16 %v1672, %v1672
    %v1850 = vpack.c.b16 %v1673, %v1673
    %v1851 = vpack.c.b16 %v1674, %v1674
    %2029 = vst [vmem:[#allocation2] sm:$0xf] %v1675
    %2030 = vst [vmem:[#allocation2 + $0x4] sm:$0xf] %v1676
    %2031 = vst [vmem:[#allocation2 + $0x8] sm:$0xf] %v1677
    %2032 = vst [vmem:[#allocation2 + $0xc] sm:$0xf] %v1678
    %2033 = vst [vmem:[#allocation2 + $0x10] sm:$0xf] %v1679
    %2034 = vst [vmem:[#allocation2 + $0x14] sm:$0xf] %v1680
    %2035 = vst [vmem:[#allocation2 + $0x18] sm:$0xf] %v1681
    %2036 = vst [vmem:[#allocation2 + $0x1c] sm:$0xf] %v1682
    %2037 = vst [vmem:[#allocation2 + $0x20] sm:$0xf] %v1683
    %2038 = vst [vmem:[#allocation2 + $0x24] sm:$0xf] %v1684
    %2039 = vst [vmem:[#allocation2 + $0x28] sm:$0xf] %v1685
    %2040 = vst [vmem:[#allocation2 + $0x2c] sm:$0xf] %v1686
    %2041 = vst [vmem:[#allocation2 + $0x30] sm:$0xf] %v1687
    %2042 = vst [vmem:[#allocation2 + $0x34] sm:$0xf] %v1688
    %2043 = vst [vmem:[#allocation2 + $0x38] sm:$0xf] %v1689
    %2044 = vst [vmem:[#allocation2 + $0x3c] sm:$0xf] %v1690
    %2045 = vst [vmem:[#allocation2 + $0x40] sm:$0xf] %v1691
    %2046 = vst [vmem:[#allocation2 + $0x44] sm:$0xf] %v1692
    %2047 = vst [vmem:[#allocation2 + $0x48] sm:$0xf] %v1693
    %2048 = vst [vmem:[#allocation2 + $0x4c] sm:$0xf] %v1694
    %2049 = vst [vmem:[#allocation2 + $0x50] sm:$0xf] %v1695
    %2050 = vst [vmem:[#allocation2 + $0x54] sm:$0xf] %v1696
    %2051 = vst [vmem:[#allocation2 + $0x58] sm:$0xf] %v1697
    %2052 = vst [vmem:[#allocation2 + $0x5c] sm:$0xf] %v1698
    %2053 = vst [vmem:[#allocation2 + $0x60] sm:$0xf] %v1699
    %2054 = vst [vmem:[#allocation2 + $0x64] sm:$0xf] %v1700
    %2055 = vst [vmem:[#allocation2 + $0x68] sm:$0xf] %v1701
    %2056 = vst [vmem:[#allocation2 + $0x6c] sm:$0xf] %v1702
    %2057 = vst [vmem:[#allocation2 + $0x70] sm:$0xf] %v1703
    %2058 = vst [vmem:[#allocation2 + $0x74] sm:$0xf] %v1704
    %2059 = vst [vmem:[#allocation2 + $0x78] sm:$0xf] %v1705
    %2060 = vst [vmem:[#allocation2 + $0x7c] sm:$0xf] %v1706
    %2061 = vst [vmem:[#allocation2 + $0x80] sm:$0xf] %v1707
    %2062 = vst [vmem:[#allocation2 + $0x84] sm:$0xf] %v1708
    %2063 = vst [vmem:[#allocation2 + $0x88] sm:$0xf] %v1709
    %2064 = vst [vmem:[#allocation2 + $0x8c] sm:$0xf] %v1710
    %2065 = vst [vmem:[#allocation2 + $0x90] sm:$0xf] %v1711
    %2066 = vst [vmem:[#allocation2 + $0x94] sm:$0xf] %v1712
    %2067 = vst [vmem:[#allocation2 + $0x98] sm:$0xf] %v1713
    %2068 = vst [vmem:[#allocation2 + $0x9c] sm:$0xf] %v1714
    %2069 = vst [vmem:[#allocation2 + $0xa0] sm:$0xf] %v1715
    %2070 = vst [vmem:[#allocation2 + $0xa4] sm:$0xf] %v1716
    %2071 = vst [vmem:[#allocation2 + $0xa8] sm:$0xf] %v1717
    %2072 = vst [vmem:[#allocation2 + $0xac] sm:$0xf] %v1718
    %2073 = vst [vmem:[#allocation2 + $0xb0] sm:$0xf] %v1719
    %2074 = vst [vmem:[#allocation2 + $0xb4] sm:$0xf] %v1720
    %2075 = vst [vmem:[#allocation2 + $0xb8] sm:$0xf] %v1721
    %2076 = vst [vmem:[#allocation2 + $0xbc] sm:$0xf] %v1722
    %2077 = vst [vmem:[#allocation2 + $0xc0] sm:$0xf] %v1723
    %2078 = vst [vmem:[#allocation2 + $0xc4] sm:$0xf] %v1724
    %2079 = vst [vmem:[#allocation2 + $0xc8] sm:$0xf] %v1725
    %2080 = vst [vmem:[#allocation2 + $0xcc] sm:$0xf] %v1726
    %2081 = vst [vmem:[#allocation2 + $0xd0] sm:$0xf] %v1727
    %2082 = vst [vmem:[#allocation2 + $0xd4] sm:$0xf] %v1728
    %2083 = vst [vmem:[#allocation2 + $0xd8] sm:$0xf] %v1729
    %2084 = vst [vmem:[#allocation2 + $0xdc] sm:$0xf] %v1730
    %2085 = vst [vmem:[#allocation2 + $0xe0] sm:$0xf] %v1731
    %2086 = vst [vmem:[#allocation2 + $0xe4] sm:$0xf] %v1732
    %2087 = vst [vmem:[#allocation2 + $0xe8] sm:$0xf] %v1733
    %2088 = vst [vmem:[#allocation2 + $0xec] sm:$0xf] %v1734
    %2089 = vst [vmem:[#allocation2 + $0xf0] sm:$0xf] %v1735
    %2090 = vst [vmem:[#allocation2 + $0xf4] sm:$0xf] %v1736
    %2091 = vst [vmem:[#allocation2 + $0xf8] sm:$0xf] %v1737
    %2092 = vst [vmem:[#allocation2 + $0xfc] sm:$0xf] %v1738
    %2093 = vst [vmem:[#allocation2 + $0x100] sm:$0xf] %v1739
    %2094 = vst [vmem:[#allocation2 + $0x104] sm:$0xf] %v1740
    %2095 = vst [vmem:[#allocation2 + $0x108] sm:$0xf] %v1741
    %2096 = vst [vmem:[#allocation2 + $0x10c] sm:$0xf] %v1742
    %2097 = vst [vmem:[#allocation2 + $0x110] sm:$0xf] %v1743
    %2098 = vst [vmem:[#allocation2 + $0x114] sm:$0xf] %v1744
    %2099 = vst [vmem:[#allocation2 + $0x118] sm:$0xf] %v1745
    %2100 = vst [vmem:[#allocation2 + $0x11c] sm:$0xf] %v1746
    %2101 = vst [vmem:[#allocation2 + $0x120] sm:$0xf] %v1747
    %2102 = vst [vmem:[#allocation2 + $0x124] sm:$0xf] %v1748
    %2103 = vst [vmem:[#allocation2 + $0x128] sm:$0xf] %v1749
    %2104 = vst [vmem:[#allocation2 + $0x12c] sm:$0xf] %v1750
    %2105 = vst [vmem:[#allocation2 + $0x130] sm:$0xf] %v1751
    %2106 = vst [vmem:[#allocation2 + $0x134] sm:$0xf] %v1752
    %2107 = vst [vmem:[#allocation2 + $0x138] sm:$0xf] %v1753
    %2108 = vst [vmem:[#allocation2 + $0x13c] sm:$0xf] %v1754
    %2109 = vst [vmem:[#allocation2 + $0x140] sm:$0xf] %v1755
    %2110 = vst [vmem:[#allocation2 + $0x144] sm:$0xf] %v1756
    %2111 = vst [vmem:[#allocation2 + $0x148] sm:$0xf] %v1757
    %2112 = vst [vmem:[#allocation2 + $0x14c] sm:$0xf] %v1758
    %2113 = vst [vmem:[#allocation2 + $0x150] sm:$0xf] %v1759
    %2114 = vst [vmem:[#allocation2 + $0x154] sm:$0xf] %v1760
    %2115 = vst [vmem:[#allocation2 + $0x158] sm:$0xf] %v1761
    %2116 = vst [vmem:[#allocation2 + $0x15c] sm:$0xf] %v1762
    %2117 = vst [vmem:[#allocation2 + $0x160] sm:$0xf] %v1763
    %2118 = vst [vmem:[#allocation2 + $0x164] sm:$0xf] %v1764
    %2119 = vst [vmem:[#allocation2 + $0x168] sm:$0xf] %v1765
    %2120 = vst [vmem:[#allocation2 + $0x16c] sm:$0xf] %v1766
    %2121 = vst [vmem:[#allocation2 + $0x170] sm:$0xf] %v1767
    %2122 = vst [vmem:[#allocation2 + $0x174] sm:$0xf] %v1768
    %2123 = vst [vmem:[#allocation2 + $0x178] sm:$0xf] %v1769
    %2124 = vst [vmem:[#allocation2 + $0x17c] sm:$0xf] %v1770
    %2125 = vst [vmem:[#allocation2 + $0x180] sm:$0xf] %v1771
    %2126 = vst [vmem:[#allocation2 + $0x184] sm:$0xf] %v1772
    %2127 = vst [vmem:[#allocation2 + $0x188] sm:$0xf] %v1773
    %2128 = vst [vmem:[#allocation2 + $0x18c] sm:$0xf] %v1774
    %2129 = vst [vmem:[#allocation2 + $0x190] sm:$0xf] %v1775
    %2130 = vst [vmem:[#allocation2 + $0x194] sm:$0xf] %v1776
    %2131 = vst [vmem:[#allocation2 + $0x198] sm:$0xf] %v1777
    %2132 = vst [vmem:[#allocation2 + $0x19c] sm:$0xf] %v1778
    %2133 = vst [vmem:[#allocation2 + $0x1a0] sm:$0xf] %v1779
    %2134 = vst [vmem:[#allocation2 + $0x1a4] sm:$0xf] %v1780
    %2135 = vst [vmem:[#allocation2 + $0x1a8] sm:$0xf] %v1781
    %2136 = vst [vmem:[#allocation2 + $0x1ac] sm:$0xf] %v1782
    %2137 = vst [vmem:[#allocation2 + $0x1b0] sm:$0xf] %v1783
    %2138 = vst [vmem:[#allocation2 + $0x1b4] sm:$0xf] %v1784
    %2139 = vst [vmem:[#allocation2 + $0x1b8] sm:$0xf] %v1785
    %2140 = vst [vmem:[#allocation2 + $0x1bc] sm:$0xf] %v1786
    %2141 = vst [vmem:[#allocation2 + $0x1c0] sm:$0xf] %v1787
    %2142 = vst [vmem:[#allocation2 + $0x1c4] sm:$0xf] %v1788
    %2143 = vst [vmem:[#allocation2 + $0x1c8] sm:$0xf] %v1789
    %2144 = vst [vmem:[#allocation2 + $0x1cc] sm:$0xf] %v1790
    %2145 = vst [vmem:[#allocation2 + $0x1d0] sm:$0xf] %v1791
    %2146 = vst [vmem:[#allocation2 + $0x1d4] sm:$0xf] %v1792
    %2147 = vst [vmem:[#allocation2 + $0x1d8] sm:$0xf] %v1793
    %2148 = vst [vmem:[#allocation2 + $0x1dc] sm:$0xf] %v1794
    %2149 = vst [vmem:[#allocation2 + $0x1e0] sm:$0xf] %v1795
    %2150 = vst [vmem:[#allocation2 + $0x1e4] sm:$0xf] %v1796
    %2151 = vst [vmem:[#allocation2 + $0x1e8] sm:$0xf] %v1797
    %2152 = vst [vmem:[#allocation2 + $0x1ec] sm:$0xf] %v1798
    %2153 = vst [vmem:[#allocation2 + $0x1f0] sm:$0xf] %v1799
    %2154 = vst [vmem:[#allocation2 + $0x1f4] sm:$0xf] %v1800
    %2155 = vst [vmem:[#allocation2 + $0x1f8] sm:$0xf] %v1801
    %2156 = vst [vmem:[#allocation2 + $0x1fc] sm:$0xf] %v1802
    %2157 = vst [vmem:[#allocation2 + $0x200] sm:$0xf] %v1803
    %2158 = vst [vmem:[#allocation2 + $0x204] sm:$0xf] %v1804
    %2159 = vst [vmem:[#allocation2 + $0x208] sm:$0xf] %v1805
    %2160 = vst [vmem:[#allocation2 + $0x20c] sm:$0xf] %v1806
    %2161 = vst [vmem:[#allocation2 + $0x210] sm:$0xf] %v1807
    %2162 = vst [vmem:[#allocation2 + $0x214] sm:$0xf] %v1808
    %2163 = vst [vmem:[#allocation2 + $0x218] sm:$0xf] %v1809
    %2164 = vst [vmem:[#allocation2 + $0x21c] sm:$0xf] %v1810
    %2165 = vst [vmem:[#allocation2 + $0x220] sm:$0xf] %v1811
    %2166 = vst [vmem:[#allocation2 + $0x224] sm:$0xf] %v1812
    %2167 = vst [vmem:[#allocation2 + $0x228] sm:$0xf] %v1813
    %2168 = vst [vmem:[#allocation2 + $0x22c] sm:$0xf] %v1814
    %2169 = vst [vmem:[#allocation2 + $0x230] sm:$0xf] %v1815
    %2170 = vst [vmem:[#allocation2 + $0x234] sm:$0xf] %v1816
    %2171 = vst [vmem:[#allocation2 + $0x238] sm:$0xf] %v1817
    %2172 = vst [vmem:[#allocation2 + $0x23c] sm:$0xf] %v1818
    %2173 = vst [vmem:[#allocation2 + $0x240] sm:$0xf] %v1819
    %2174 = vst [vmem:[#allocation2 + $0x244] sm:$0xf] %v1820
    %2175 = vst [vmem:[#allocation2 + $0x248] sm:$0xf] %v1821
    %2176 = vst [vmem:[#allocation2 + $0x24c] sm:$0xf] %v1822
    %2177 = vst [vmem:[#allocation2 + $0x250] sm:$0xf] %v1823
    %2178 = vst [vmem:[#allocation2 + $0x254] sm:$0xf] %v1824
    %2179 = vst [vmem:[#allocation2 + $0x258] sm:$0xf] %v1825
    %2180 = vst [vmem:[#allocation2 + $0x25c] sm:$0xf] %v1826
    %2181 = vst [vmem:[#allocation2 + $0x260] sm:$0xf] %v1827
    %2182 = vst [vmem:[#allocation2 + $0x264] sm:$0xf] %v1828
    %2183 = vst [vmem:[#allocation2 + $0x268] sm:$0xf] %v1829
    %2184 = vst [vmem:[#allocation2 + $0x26c] sm:$0xf] %v1830
    %2185 = vst [vmem:[#allocation2 + $0x270] sm:$0xf] %v1831
    %2186 = vst [vmem:[#allocation2 + $0x274] sm:$0xf] %v1832
    %2187 = vst [vmem:[#allocation2 + $0x278] sm:$0xf] %v1833
    %2188 = vst [vmem:[#allocation2 + $0x27c] sm:$0xf] %v1834
    %2189 = vst [vmem:[#allocation2 + $0x280] sm:$0xf] %v1835
    %2190 = vst [vmem:[#allocation2 + $0x284] sm:$0xf] %v1836
    %2191 = vst [vmem:[#allocation2 + $0x288] sm:$0xf] %v1837
    %2192 = vst [vmem:[#allocation2 + $0x28c] sm:$0xf] %v1838
    %2193 = vst [vmem:[#allocation2 + $0x290] sm:$0xf] %v1839
    %2194 = vst [vmem:[#allocation2 + $0x294] sm:$0xf] %v1840
    %2195 = vst [vmem:[#allocation2 + $0x298] sm:$0xf] %v1841
    %2196 = vst [vmem:[#allocation2 + $0x29c] sm:$0xf] %v1842
    %2197 = vst [vmem:[#allocation2 + $0x2a0] sm:$0xf] %v1843
    %2198 = vst [vmem:[#allocation2 + $0x2a4] sm:$0xf] %v1844
    %2199 = vst [vmem:[#allocation2 + $0x2a8] sm:$0xf] %v1845
    %2200 = vst [vmem:[#allocation2 + $0x2ac] sm:$0xf] %v1846
    %2201 = vst [vmem:[#allocation2 + $0x2b0] sm:$0xf] %v1847
    %2202 = vst [vmem:[#allocation2 + $0x2b4] sm:$0xf] %v1848
    %2203 = vst [vmem:[#allocation2 + $0x2b8] sm:$0xf] %v1849
    %2204 = vst [vmem:[#allocation2 + $0x2bc] sm:$0xf] %v1850
    %2205 = vst [vmem:[#allocation2 + $0x2c0] sm:$0xf] %v1851
    // Predicated region
    $region14: #{tpu_custom_call.1} parent=1 // pred_check
      _
    $region15: #{tpu_custom_call.1} parent=1 // pred_check_branch
      %2207 = sbr.rel (0) target = $region17
    $region16: #{tpu_custom_call.1} parent=1 // pred_region
      %s2209 = ssub.s32 11328, 11328
      %2210 = vsyncadd [#allocation3], %s2209
      %s2211 = sshll.u32 [#allocation2], 4
      %s2212 = int_to_ptr.vmem [resolvable:$true] %s2211
      %2217 = dma.vmem_to_hbm [thread:$0]  %s2212, 11328, %s3, [#allocation3], 64, 64, 4
    $region17: #{tpu_custom_call.1} parent=1 // pred_fallthru
      _
    // Predicated region
    $region18: #{tpu_custom_call.1} parent=1 // pred_check
      _
    $region19: #{tpu_custom_call.1} parent=1 // pred_check_branch
      %2219 = sbr.rel (0) target = $region21
    $region20: #{tpu_custom_call.1} parent=1 // pred_region
      %2220 = dma.done [#allocation3], 11328
    $region21: #{tpu_custom_call.1} parent=1 // pred_fallthru
      _
    %2221 = vsyncpa [#allocation3], 1

</llo_original>
